<compile_context>
chip_gen: v6e
topology: v6e:2x2x1
jax: 0.10.0
libtpu: 0.0.40
codegen_flags: <defaults>
</compile_context>

<pallas_src>
import jax
import jax.numpy as jnp
from jax import lax
from jax.experimental import pallas as pl
from jax.experimental.pallas import tpu as pltpu


# Contraction dims: _NT = x @ W^T for PyTorch (out, in) weights,
#                   _NN = x @ W  for the pre-transposed (in, out) weight.
_NT = (((1,), (1,)), ((), ()))
_NN = (((1,), (0,)), ((), ()))

# Tile-size targets (largest divisor <= target picked per shape).
_TB_TARGET = 512   # batch rows per grid step
_TK_TARGET = 512   # in_channel reduction tile (encoder first layer)
_TN_TARGET = 512   # in_channel output tile (decoder second layer)


def _pick_channel_tile(dim, target):
    t = min(dim, target)
    for c in range(t, 0, -1):
        if dim % c == 0 and (c % 128 == 0 or c == dim):
            return c
    return dim


def _pick_batch_tile(dim, target):
    # multiple of 16 (bf16 sublane pack) or the full batch dim.
    t = min(dim, target)
    for c in range(t, 0, -1):
        if dim % c == 0 and (c % 16 == 0 or c == dim):
            return c
    return dim


# --------------------------------------------------------------------------
# Kernel A: encoder.  Grid (batch tiles, K tiles); enc.W1^T streamed over K.
# --------------------------------------------------------------------------
def _encoder_kernel(x_ref, w1e_ref, b1e_ref, w2e_ref, b2e_ref, ze_ref, acc_ref):
    k = pl.program_id(1)
    nk = pl.num_programs(1)
    f32 = jnp.float32

    @pl.when(k == 0)
    def _init():
        acc_ref[...] = jnp.zeros_like(acc_ref)

    # partial x @ W1^T (W1 stored pre-transposed -> contiguous (tk, hid) tile)
    acc_ref[...] += lax.dot_general(x_ref[...], w1e_ref[...], _NN,
                                    preferred_element_type=f32)

    @pl.when(k == nk - 1)
    def _finalize():
        h = jax.nn.sigmoid(acc_ref[...] + b1e_ref[...])
        z = lax.dot_general(h.astype(w2e_ref.dtype), w2e_ref[...], _NT,
                            preferred_element_type=f32) + b2e_ref[...]
        ze_ref[...] = z.astype(ze_ref.dtype)


# --------------------------------------------------------------------------
# Kernel B: decoder.  Grid (batch tiles, N tiles); dec.W2 streamed over N.
# Decoder hidden is computed once per batch tile (n == 0) into VMEM scratch.
# --------------------------------------------------------------------------
def _decoder_kernel(ze_ref, w1d_ref, b1d_ref, w2d_ref, b2d_ref, xhat_ref, hd_ref):
    n = pl.program_id(1)
    f32 = jnp.float32

    @pl.when(n == 0)
    def _head():
        hd = jax.nn.sigmoid(
            lax.dot_general(ze_ref[...], w1d_ref[...], _NT,
                            preferred_element_type=f32) + b1d_ref[...])
        hd_ref[...] = hd.astype(hd_ref.dtype)

    # streamed decoder output tile: x_hat[:, n*tn:(n+1)*tn]
    xt = lax.dot_general(hd_ref[...], w2d_ref[...], _NT,
                         preferred_element_type=f32)
    xhat_ref[...] = (xt + b2d_ref[...]).astype(xhat_ref.dtype)


# --------------------------------------------------------------------------
# Parameter prep (one-time, outside the hot path)
# --------------------------------------------------------------------------
def prepare_params(params):
    """Cast matmul weights to bf16.  enc.W1 is stored TRANSPOSED as
    (in_channel, hidden) so the streamed K tile is one contiguous HBM slab;
    every other weight keeps the PyTorch (out, in) layout.  Biases become f32
    row vectors."""
    bf16, f32 = jnp.bfloat16, jnp.float32
    w = lambda a: jnp.asarray(a, f32).astype(bf16)
    bvec = lambda a: jnp.asarray(a, f32).reshape(1, -1)
    return dict(
        w1e_t=w(params["enc_W1_w"]).T, b1e=bvec(params["enc_W1_b"]),
        w2e=w(params["enc_W2_w"]), b2e=bvec(params["enc_W2_b"]),
        w1d=w(params["dec_W1_w"]), b1d=bvec(params["dec_W1_b"]),
        w2d=w(params["dec_W2_w"]), b2d=bvec(params["dec_W2_b"]),
        w1p=w(params["pred_W1_w"]), b1p=bvec(params["pred_W1_b"]),
        w2p=w(params["pred_W2_w"]), b2p=bvec(params["pred_W2_b"]),
        l=w(params["disc_L_w"]),
    )


# --------------------------------------------------------------------------
# Forward
# --------------------------------------------------------------------------
@jax.jit
def diae_forward(x, p):
    """x: (B, in_channel).  Returns (x_hat, y_pred, j_e + j_d + j_p, j_l)."""
    f32, bf16 = jnp.float32, jnp.bfloat16
    B = x.shape[0]
    x2 = x.reshape(B, -1).astype(bf16)          # torch: x.view(B, -1)
    in_ch = x2.shape[1]
    hid = p["w1e_t"].shape[1]
    z_dim = p["w2e"].shape[0]

    tb = _pick_batch_tile(B, _TB_TARGET)
    tk = _pick_channel_tile(in_ch, _TK_TARGET)
    tn = _pick_channel_tile(in_ch, _TN_TARGET)
    nb, nk, nn = B // tb, in_ch // tk, in_ch // tn

    # No revisited scalar/side outputs remain -> batch axis can be "parallel"
    # (megacore sharding on v7x); reduction / streamed axis stays "arbitrary".
    cparams = pltpu.CompilerParams(
        dimension_semantics=("parallel", "arbitrary"))

    # ---- Kernel A: encoder (enc.W1^T streamed over K) ---------------------
    ce_enc = pl.CostEstimate(
        flops=2 * B * in_ch * hid + 2 * B * hid * z_dim,
        transcendentals=B * hid,
        bytes_accessed=B * in_ch * 2 + nb * in_ch * hid * 2
                       + z_dim * hid * 2 + B * z_dim * 2)
    z_e = pl.pallas_call(
        _encoder_kernel,
        grid=(nb, nk),
        in_specs=[
            pl.BlockSpec((tb, tk), lambda b, k: (b, k)),        # x (streamed)
            pl.BlockSpec((tk, hid), lambda b, k: (k, 0)),       # enc.W1^T (streamed, contiguous tile)
            pl.BlockSpec((1, hid), lambda b, k: (0, 0)),        # enc.b1 (resident)
            pl.BlockSpec((z_dim, hid), lambda b, k: (0, 0)),    # enc.W2 (resident)
            pl.BlockSpec((1, z_dim), lambda b, k: (0, 0)),      # enc.b2 (resident)
        ],
        out_specs=pl.BlockSpec((tb, z_dim), lambda b, k: (b, 0)),
        out_shape=jax.ShapeDtypeStruct((B, z_dim), bf16),       # bf16 z_e
        scratch_shapes=[pltpu.VMEM((tb, hid), f32)],            # f32 accumulator
        compiler_params=cparams,
        cost_estimate=ce_enc,
    )(x2, p["w1e_t"], p["b1e"], p["w2e"], p["b2e"])

    # ---- Kernel B: decoder (dec.W2 streamed over N) -----------------------
    ce_dec = pl.CostEstimate(
        flops=2 * B * z_dim * hid + 2 * B * hid * in_ch,
        transcendentals=B * hid,
        bytes_accessed=B * z_dim * 2 + nb * in_ch * hid * 2
                       + hid * z_dim * 2 + B * in_ch * 4)
    x_hat = pl.pallas_call(
        _decoder_kernel,
        grid=(nb, nn),
        in_specs=[
            pl.BlockSpec((tb, z_dim), lambda b, n: (b, 0)),     # z_e
            pl.BlockSpec((hid, z_dim), lambda b, n: (0, 0)),    # dec.W1 (resident)
            pl.BlockSpec((1, hid), lambda b, n: (0, 0)),        # dec.b1 (resident)
            pl.BlockSpec((tn, hid), lambda b, n: (n, 0)),       # dec.W2 (streamed; FIXED index_map)
            pl.BlockSpec((1, tn), lambda b, n: (0, n)),         # dec.b2 (streamed)
        ],
        out_specs=pl.BlockSpec((tb, tn), lambda b, n: (b, n)),  # x_hat (streamed)
        out_shape=jax.ShapeDtypeStruct((B, in_ch), f32),
        scratch_shapes=[pltpu.VMEM((tb, hid), bf16)],           # decoder hidden
        compiler_params=cparams,
        cost_estimate=ce_dec,
    )(z_e, p["w1d"], p["b1d"], p["w2d"], p["b2d"])

    # ---- Predictor + discriminant: tiny, plain JAX on z_e -----------------
    hp = jnp.maximum(
        lax.dot_general(z_e, p["w1p"], _NT, preferred_element_type=f32)
        + p["b1p"], 0.0)
    yh = jax.nn.sigmoid(
        lax.dot_general(hp.astype(bf16), p["w2p"], _NT,
                        preferred_element_type=f32) + p["b2p"])
    y_pred = lax.dot_general(yh.astype(bf16), p["l"], _NT,
                             preferred_element_type=f32)

    # ---- Weight penalties: plain JAX (transpose of enc.W1 is irrelevant) --
    sq = lambda w: jnp.sum(jnp.square(w.astype(f32)))
    j_reg = (sq(p["w1e_t"]) + sq(p["w2e"])          # j_e
             + sq(p["w1d"]) + sq(p["w2d"])          # j_d
             + sq(p["w1p"]) + sq(p["w2p"]))         # j_p
    lf = p["l"].astype(f32)
    j_l = jnp.sum(jnp.square(lf - lf.T))
    return x_hat, y_pred, j_reg, j_l


# --------------------------------------------------------------------------
# Reference (same mixed precision: bf16 weights/activations, f32 accumulate)
# --------------------------------------------------------------------------
def diae_reference(x, p):
    f32, bf16 = jnp.float32, jnp.bfloat16
    xb = x.reshape(x.shape[0], -1).astype(bf16)
    sq = lambda w: jnp.sum(jnp.square(w.astype(f32)))

    h = jax.nn.sigmoid(
        lax.dot_general(xb, p["w1e_t"], _NN, preferred_element_type=f32)
        + p["b1e"])
    z_e = lax.dot_general(h.astype(bf16), p["w2e"], _NT,
                          preferred_element_type=f32) + p["b2e"]
    zb = z_e.astype(bf16)

    hd = jax.nn.sigmoid(
        lax.dot_general(zb, p["w1d"], _NT, preferred_element_type=f32)
        + p["b1d"])
    x_hat = lax.dot_general(hd.astype(bf16), p["w2d"], _NT,
                            preferred_element_type=f32) + p["b2d"]

    hp = jnp.maximum(
        lax.dot_general(zb, p["w1p"], _NT, preferred_element_type=f32)
        + p["b1p"], 0.0)
    yh = jax.nn.sigmoid(
        lax.dot_general(hp.astype(bf16), p["w2p"], _NT,
                        preferred_element_type=f32) + p["b2p"])
    y_pred = lax.dot_general(yh.astype(bf16), p["l"], _NT,
                             preferred_element_type=f32)

    j_reg = (sq(p["w1e_t"]) + sq(p["w2e"]) + sq(p["w1d"]) + sq(p["w2d"])
             + sq(p["w1p"]) + sq(p["w2p"]))
    lf = p["l"].astype(f32)
    j_l = jnp.sum(jnp.square(lf - lf.T))
    return x_hat, y_pred, j_reg, j_l


def make_params(key, in_channel, hidden_dim, z_dim, pred_hidden, out_channel):
    """Deterministic synthetic parameters, PyTorch nn.Linear layout (out, in)."""
    ks = jax.random.split(key, 14)

    def lin(kw, kb, out_d, in_d):
        bound = 1.0 / jnp.sqrt(in_d)
        w = jax.random.uniform(kw, (out_d, in_d), jnp.float32, -bound, bound)
        b = jax.random.uniform(kb, (out_d,), jnp.float32, -bound, bound)
        return w, b

    p = {}
    p["enc_W1_w"], p["enc_W1_b"] = lin(ks[0], ks[1], hidden_dim, in_channel)
    p["enc_W2_w"], p["enc_W2_b"] = lin(ks[2], ks[3], z_dim, hidden_dim)
    p["dec_W1_w"], p["dec_W1_b"] = lin(ks[4], ks[5], hidden_dim, z_dim)
    p["dec_W2_w"], p["dec_W2_b"] = lin(ks[6], ks[7], in_channel, hidden_dim)
    p["pred_W1_w"], p["pred_W1_b"] = lin(ks[8], ks[9], pred_hidden, z_dim)
    p["pred_W2_w"], p["pred_W2_b"] = lin(ks[10], ks[11], out_channel, pred_hidden)
    p["disc_L_w"], _ = lin(ks[12], ks[13], out_channel, out_channel)
    return p


if __name__ == "__main__":
    # Small shapes consistent with the module structure (original defaults:
    # in_channel=10240, hidden=1024, z=256, prediction_hidden=32, out=1).
    # IN_CH=1024 with 512-wide tiles exercises the K/N streaming (2 tiles per
    # axis) and the f32 accumulator / finalize path.
    B, IN_CH, HID, Z, PHID, OUT = 8, 1024, 256, 128, 32, 1

    key = jax.random.PRNGKey(0)
    kx, kp = jax.random.split(key)
    x = jax.random.normal(kx, (B, IN_CH), jnp.float32)
    raw = make_params(kp, IN_CH, HID, Z, PHID, OUT)
    params = prepare_params(raw)     # one-time bf16 cast + enc.W1 transpose

    x_hat, y_pred, j_reg, j_l = diae_forward(x, params)
    jax.block_until_ready((x_hat, y_pred, j_reg, j_l))

    # Correctness check against a pure-JAX reference with identical mixed
    # precision (bf16 into the MXU, f32 accumulation, bf16 z_e).
    r_xhat, r_ypred, r_jreg, r_jl = diae_reference(x, params)
    assert jnp.allclose(x_hat, r_xhat, atol=2e-2, rtol=2e-2), \
        float(jnp.max(jnp.abs(x_hat - r_xhat)))
    assert jnp.allclose(y_pred, r_ypred, atol=2e-2, rtol=2e-2), \
        float(jnp.max(jnp.abs(y_pred - r_ypred)))
    assert jnp.allclose(j_reg, r_jreg, rtol=1e-5, atol=1e-3)
    assert jnp.allclose(j_l, r_jl, atol=1e-5)

    print("KERNEL_OK")
</pallas_src>

<mosaic_0001>
module attributes {stable_mosaic.version = 11 : i64} {
  func.func @_encoder_kernel(%arg0: i32, %arg1: i32, %arg2: memref<8x512xbf16, #tpu.memory_space<vmem>>, %arg3: memref<512x256xbf16, #tpu.memory_space<vmem>>, %arg4: memref<1x256xf32, #tpu.memory_space<vmem>>, %arg5: memref<128x256xbf16, #tpu.memory_space<vmem>>, %arg6: memref<1x128xf32, #tpu.memory_space<vmem>>, %arg7: memref<8x128xbf16, #tpu.memory_space<vmem>>, %arg8: memref<8x256xf32, #tpu.memory_space<vmem>>) attributes {dimension_semantics = [#tpu.dimension_semantics<parallel>, #tpu.dimension_semantics<arbitrary>], iteration_bounds = array<i64: 1, 2>, scalar_prefetch = 0 : i64, scratch_operands = 1 : i64, tpu.core_type = #tpu.core_type<tc>, window_params = [{transform_indices = @transform_0, window_bounds = array<i64: 8, 512>}, {transform_indices = @transform_1, window_bounds = array<i64: 512, 256>}, {pipeline_mode = #tpu.pipeline_mode<synchronous>, transform_indices = @transform_2, window_bounds = array<i64: 1, 256>}, {pipeline_mode = #tpu.pipeline_mode<synchronous>, transform_indices = @transform_3, window_bounds = array<i64: 128, 256>}, {pipeline_mode = #tpu.pipeline_mode<synchronous>, transform_indices = @transform_4, window_bounds = array<i64: 1, 128>}, {transform_indices = @transform_5, window_bounds = array<i64: 8, 128>}]} {
    %c0_i32 = arith.constant 0 : i32
    %0 = arith.cmpi eq, %arg1, %c0_i32 : i32
    %1 = arith.extui %0 : i1 to i32
    %c0_i32_0 = arith.constant 0 : i32
    %2 = arith.cmpi ne, %1, %c0_i32_0 : i32
    scf.if %2 {
      %cst_9 = arith.constant 0.000000e+00 : f32
      %12 = vector.broadcast %cst_9 : f32 to vector<8x256xf32>
      %c0_10 = arith.constant 0 : index
      %c0_11 = arith.constant 0 : index
      %13 = vector.load %arg8[%c0_10, %c0_11] : memref<8x256xf32, #tpu.memory_space<vmem>>, vector<8x256xf32>
      tpu.vector_store %arg8[%c0_10, %c0_11], %12 {strides = array<i32>} : memref<8x256xf32, #tpu.memory_space<vmem>>, vector<8x256xf32>,
    } else {
    }
    %c0 = arith.constant 0 : index
    %c0_1 = arith.constant 0 : index
    %3 = vector.load %arg8[%c0, %c0_1] : memref<8x256xf32, #tpu.memory_space<vmem>>, vector<8x256xf32>
    %c0_2 = arith.constant 0 : index
    %c0_3 = arith.constant 0 : index
    %4 = vector.load %arg2[%c0_2, %c0_3] : memref<8x512xbf16, #tpu.memory_space<vmem>>, vector<8x512xbf16>
    %c0_4 = arith.constant 0 : index
    %c0_5 = arith.constant 0 : index
    %5 = vector.load %arg3[%c0_4, %c0_5] : memref<512x256xbf16, #tpu.memory_space<vmem>>, vector<512x256xbf16>
    %cst = arith.constant dense<0.000000e+00> : vector<8x256xf32>
    %6 = tpu.matmul %4, %5, %cst {dimension_numbers = #tpu.dot_dimension_numbers<[1], [0], [0], [1], [0, 0, 1, 1], [], []>} : vector<8x512xbf16>, vector<512x256xbf16>, vector<8x256xf32> -> vector<8x256xf32>
    %7 = arith.addf %3, %6 : vector<8x256xf32>
    %c0_6 = arith.constant 0 : index
    %c0_7 = arith.constant 0 : index
    %8 = vector.load %arg8[%c0_6, %c0_7] : memref<8x256xf32, #tpu.memory_space<vmem>>, vector<8x256xf32>
    tpu.vector_store %arg8[%c0_6, %c0_7], %7 {strides = array<i32>} : memref<8x256xf32, #tpu.memory_space<vmem>>, vector<8x256xf32>,
    %c1_i32 = arith.constant 1 : i32
    %9 = arith.cmpi eq, %arg1, %c1_i32 : i32
    %10 = arith.extui %9 : i1 to i32
    %c0_i32_8 = arith.constant 0 : i32
    %11 = arith.cmpi ne, %10, %c0_i32_8 : i32
    scf.if %11 {
      %c0_9 = arith.constant 0 : index
      %c0_10 = arith.constant 0 : index
      %12 = vector.load %arg8[%c0_9, %c0_10] : memref<8x256xf32, #tpu.memory_space<vmem>>, vector<8x256xf32>
      %c0_11 = arith.constant 0 : index
      %c0_12 = arith.constant 0 : index
      %13 = vector.load %arg4[%c0_11, %c0_12] : memref<1x256xf32, #tpu.memory_space<vmem>>, vector<1x256xf32>
      %14 = vector.broadcast %13 : vector<1x256xf32> to vector<8x256xf32>
      %15 = arith.addf %12, %14 : vector<8x256xf32>
      %16 = arith.negf %15 : vector<8x256xf32>
      %17 = math.exp %16 : vector<8x256xf32>
      %cst_13 = arith.constant 1.000000e+00 : f32
      %18 = vector.broadcast %cst_13 : f32 to vector<8x256xf32>
      %19 = arith.addf %18, %17 : vector<8x256xf32>
      %20 = arith.divf %18, %19 : vector<8x256xf32>
      %21 = arith.truncf %20 : vector<8x256xf32> to vector<8x256xbf16>
      %c0_14 = arith.constant 0 : index
      %c0_15 = arith.constant 0 : index
      %22 = vector.load %arg5[%c0_14, %c0_15] : memref<128x256xbf16, #tpu.memory_space<vmem>>, vector<128x256xbf16>
      %cst_16 = arith.constant dense<0.000000e+00> : vector<8x128xf32>
      %23 = tpu.matmul %21, %22, %cst_16 {dimension_numbers = #tpu.dot_dimension_numbers<[1], [1], [0], [0], [0, 0, 1, 0], [], []>} : vector<8x256xbf16>, vector<128x256xbf16>, vector<8x128xf32> -> vector<8x128xf32>
      %c0_17 = arith.constant 0 : index
      %c0_18 = arith.constant 0 : index
      %24 = vector.load %arg6[%c0_17, %c0_18] : memref<1x128xf32, #tpu.memory_space<vmem>>, vector<1x128xf32>
      %25 = vector.broadcast %24 : vector<1x128xf32> to vector<8x128xf32>
      %26 = arith.addf %23, %25 : vector<8x128xf32>
      %27 = arith.truncf %26 : vector<8x128xf32> to vector<8x128xbf16>
      %c0_19 = arith.constant 0 : index
      %c0_20 = arith.constant 0 : index
      %28 = vector.load %arg7[%c0_19, %c0_20] : memref<8x128xbf16, #tpu.memory_space<vmem>>, vector<8x128xbf16>
      tpu.vector_store %arg7[%c0_19, %c0_20], %27 {strides = array<i32>} : memref<8x128xbf16, #tpu.memory_space<vmem>>, vector<8x128xbf16>,
    } else {
    }
    return
  }
  func.func @transform_0(%arg0: i32, %arg1: i32) -> (i32, i32) {
    %c0_i32 = arith.constant 0 : i32
    return %arg0, %arg1 : i32, i32
  }
  func.func @transform_1(%arg0: i32, %arg1: i32) -> (i32, i32) {
    %c0_i32 = arith.constant 0 : i32
    %c0_i32_0 = arith.constant 0 : i32
    return %arg1, %c0_i32 : i32, i32
  }
  func.func @transform_2(%arg0: i32, %arg1: i32) -> (i32, i32) {
    %c0_i32 = arith.constant 0 : i32
    %c0_i32_0 = arith.constant 0 : i32
    %c0_i32_1 = arith.constant 0 : i32
    return %c0_i32, %c0_i32_0 : i32, i32
  }
  func.func @transform_3(%arg0: i32, %arg1: i32) -> (i32, i32) {
    %c0_i32 = arith.constant 0 : i32
    %c0_i32_0 = arith.constant 0 : i32
    %c0_i32_1 = arith.constant 0 : i32
    return %c0_i32, %c0_i32_0 : i32, i32
  }
  func.func @transform_4(%arg0: i32, %arg1: i32) -> (i32, i32) {
    %c0_i32 = arith.constant 0 : i32
    %c0_i32_0 = arith.constant 0 : i32
    %c0_i32_1 = arith.constant 0 : i32
    return %c0_i32, %c0_i32_0 : i32, i32
  }
  func.func @transform_5(%arg0: i32, %arg1: i32) -> (i32, i32) {
    %c0_i32 = arith.constant 0 : i32
    %c0_i32_0 = arith.constant 0 : i32
    return %arg0, %c0_i32 : i32, i32
  }
}

module attributes {stable_mosaic.version = 11 : i64} {
  func.func @_decoder_kernel(%arg0: i32, %arg1: i32, %arg2: memref<8x128xbf16, #tpu.memory_space<vmem>>, %arg3: memref<256x128xbf16, #tpu.memory_space<vmem>>, %arg4: memref<1x256xf32, #tpu.memory_space<vmem>>, %arg5: memref<512x256xbf16, #tpu.memory_space<vmem>>, %arg6: memref<1x512xf32, #tpu.memory_space<vmem>>, %arg7: memref<8x512xf32, #tpu.memory_space<vmem>>, %arg8: memref<8x256xbf16, #tpu.memory_space<vmem>>) attributes {dimension_semantics = [#tpu.dimension_semantics<parallel>, #tpu.dimension_semantics<arbitrary>], iteration_bounds = array<i64: 1, 2>, scalar_prefetch = 0 : i64, scratch_operands = 1 : i64, tpu.core_type = #tpu.core_type<tc>, window_params = [{transform_indices = @transform_0, window_bounds = array<i64: 8, 128>}, {pipeline_mode = #tpu.pipeline_mode<synchronous>, transform_indices = @transform_1, window_bounds = array<i64: 256, 128>}, {pipeline_mode = #tpu.pipeline_mode<synchronous>, transform_indices = @transform_2, window_bounds = array<i64: 1, 256>}, {transform_indices = @transform_3, window_bounds = array<i64: 512, 256>}, {transform_indices = @transform_4, window_bounds = array<i64: 1, 512>}, {transform_indices = @transform_5, window_bounds = array<i64: 8, 512>}]} {
    %c0_i32 = arith.constant 0 : i32
    %0 = arith.cmpi eq, %arg1, %c0_i32 : i32
    %1 = arith.extui %0 : i1 to i32
    %c0_i32_0 = arith.constant 0 : i32
    %2 = arith.cmpi ne, %1, %c0_i32_0 : i32
    scf.if %2 {
      %c0_8 = arith.constant 0 : index
      %c0_9 = arith.constant 0 : index
      %10 = vector.load %arg2[%c0_8, %c0_9] : memref<8x128xbf16, #tpu.memory_space<vmem>>, vector<8x128xbf16>
      %c0_10 = arith.constant 0 : index
      %c0_11 = arith.constant 0 : index
      %11 = vector.load %arg3[%c0_10, %c0_11] : memref<256x128xbf16, #tpu.memory_space<vmem>>, vector<256x128xbf16>
      %cst_12 = arith.constant dense<0.000000e+00> : vector<8x256xf32>
      %12 = tpu.matmul %10, %11, %cst_12 {dimension_numbers = #tpu.dot_dimension_numbers<[1], [1], [0], [0], [0, 0, 1, 0], [], []>} : vector<8x128xbf16>, vector<256x128xbf16>, vector<8x256xf32> -> vector<8x256xf32>
      %c0_13 = arith.constant 0 : index
      %c0_14 = arith.constant 0 : index
      %13 = vector.load %arg4[%c0_13, %c0_14] : memref<1x256xf32, #tpu.memory_space<vmem>>, vector<1x256xf32>
      %14 = vector.broadcast %13 : vector<1x256xf32> to vector<8x256xf32>
      %15 = arith.addf %12, %14 : vector<8x256xf32>
      %16 = arith.negf %15 : vector<8x256xf32>
      %17 = math.exp %16 : vector<8x256xf32>
      %cst_15 = arith.constant 1.000000e+00 : f32
      %18 = vector.broadcast %cst_15 : f32 to vector<8x256xf32>
      %19 = arith.addf %18, %17 : vector<8x256xf32>
      %20 = arith.divf %18, %19 : vector<8x256xf32>
      %21 = arith.truncf %20 : vector<8x256xf32> to vector<8x256xbf16>
      %c0_16 = arith.constant 0 : index
      %c0_17 = arith.constant 0 : index
      %22 = vector.load %arg8[%c0_16, %c0_17] : memref<8x256xbf16, #tpu.memory_space<vmem>>, vector<8x256xbf16>
      tpu.vector_store %arg8[%c0_16, %c0_17], %21 {strides = array<i32>} : memref<8x256xbf16, #tpu.memory_space<vmem>>, vector<8x256xbf16>,
    } else {
    }
    %c0 = arith.constant 0 : index
    %c0_1 = arith.constant 0 : index
    %3 = vector.load %arg8[%c0, %c0_1] : memref<8x256xbf16, #tpu.memory_space<vmem>>, vector<8x256xbf16>
    %c0_2 = arith.constant 0 : index
    %c0_3 = arith.constant 0 : index
    %4 = vector.load %arg5[%c0_2, %c0_3] : memref<512x256xbf16, #tpu.memory_space<vmem>>, vector<512x256xbf16>
    %cst = arith.constant dense<0.000000e+00> : vector<8x512xf32>
    %5 = tpu.matmul %3, %4, %cst {dimension_numbers = #tpu.dot_dimension_numbers<[1], [1], [0], [0], [0, 0, 1, 0], [], []>} : vector<8x256xbf16>, vector<512x256xbf16>, vector<8x512xf32> -> vector<8x512xf32>
    %c0_4 = arith.constant 0 : index
    %c0_5 = arith.constant 0 : index
    %6 = vector.load %arg6[%c0_4, %c0_5] : memref<1x512xf32, #tpu.memory_space<vmem>>, vector<1x512xf32>
    %7 = vector.broadcast %6 : vector<1x512xf32> to vector<8x512xf32>
    %8 = arith.addf %5, %7 : vector<8x512xf32>
    %c0_6 = arith.constant 0 : index
    %c0_7 = arith.constant 0 : index
    %9 = vector.load %arg7[%c0_6, %c0_7] : memref<8x512xf32, #tpu.memory_space<vmem>>, vector<8x512xf32>
    tpu.vector_store %arg7[%c0_6, %c0_7], %8 {strides = array<i32>} : memref<8x512xf32, #tpu.memory_space<vmem>>, vector<8x512xf32>,
    return
  }
  func.func @transform_0(%arg0: i32, %arg1: i32) -> (i32, i32) {
    %c0_i32 = arith.constant 0 : i32
    %c0_i32_0 = arith.constant 0 : i32
    return %arg0, %c0_i32 : i32, i32
  }
  func.func @transform_1(%arg0: i32, %arg1: i32) -> (i32, i32) {
    %c0_i32 = arith.constant 0 : i32
    %c0_i32_0 = arith.constant 0 : i32
    %c0_i32_1 = arith.constant 0 : i32
    return %c0_i32, %c0_i32_0 : i32, i32
  }
  func.func @transform_2(%arg0: i32, %arg1: i32) -> (i32, i32) {
    %c0_i32 = arith.constant 0 : i32
    %c0_i32_0 = arith.constant 0 : i32
    %c0_i32_1 = arith.constant 0 : i32
    return %c0_i32, %c0_i32_0 : i32, i32
  }
  func.func @transform_3(%arg0: i32, %arg1: i32) -> (i32, i32) {
    %c0_i32 = arith.constant 0 : i32
    %c0_i32_0 = arith.constant 0 : i32
    return %arg1, %c0_i32 : i32, i32
  }
  func.func @transform_4(%arg0: i32, %arg1: i32) -> (i32, i32) {
    %c0_i32 = arith.constant 0 : i32
    %c0_i32_0 = arith.constant 0 : i32
    return %c0_i32, %arg1 : i32, i32
  }
  func.func @transform_5(%arg0: i32, %arg1: i32) -> (i32, i32) {
    %c0_i32 = arith.constant 0 : i32
    return %arg0, %arg1 : i32, i32
  }
}

</mosaic_0001>

<llo_original>
// kernel: diae_forward.3
$region0: #{diae_forward.3}
  #allocation0 [shape = 'u32[]', space=smem, size = 0x4, offset = 0x4, fixed_abs, tag = 'smem constant byte address 0x4 - core index']
  #allocation1 [shape = 'u32[144,128]{1,0:T(1,128)}', space=vmem, size = 0x12000, scoped, tag = 'internal scratch']
  #allocation2 [shape = 'bf16[8,256]{1,0:T(8,128)(2,1)}', space=vmem, size = 0x1000, scoped, tag = 'scratch operand']
  %s0 = inlined_call_operand.vmem [shape: bf16[8,128], index: 0, kind: input, shape index: {}]
  %s1 = inlined_call_operand.vmem [shape: bf16[256,128], index: 1, kind: input, shape index: {}]
  %s2 = inlined_call_operand.vmem [shape: f32[1,256], index: 2, kind: input, shape index: {}]
  %s3 = inlined_call_operand.vmem [shape: bf16[1024,256], index: 3, kind: input, shape index: {}]
  %s4 = inlined_call_operand.vmem [shape: f32[1,1024], index: 4, kind: input, shape index: {}]
  %s5 = inlined_call_operand.hbm [shape: f32[8,1024], index: 5, kind: output, shape index: {}]
  %s6 = sld [smem:[#allocation0]]
  $region57: #{diae_forward.3} parent=0
    _
  %s8 = ssub.s32 1, %s6
  %s9 = scalar_select 0, %s8, %s6
  $region1: #{diae_forward.3} parent=0
    #allocation3 [shape = 'u8[32768]{0}', space=vmem, size = 0x8000, scoped, tag = 'output window, operand 0']
    #allocation4 [shape = 's32[2]{0}', space=sflag, size = 0x8, scoped, tag = 'scoped memory for diae_forward.3']
    %10 = vsyncpa [#allocation4], 0
    %s11 = scalar_lea.sflag [#allocation4], 1
    %12 = vsyncpa %s11, 0
    loop: start=0, step=1, limit=4
    $region2: #{diae_forward.3} parent=1 // loop_pre_header
      _
    $region3: #{diae_forward.3} parent=1 // loop_header
      %s14 = sphi 0, %s18
      %p15 = scmp.ge.s32.totalorder %s14, 4
      %s21 = sphi 0, %s33
      %s22 = sphi 0, %s29
      %s23 = sphi 0, %s21
      %s24 = sphi 0, %s22
      %s25 = sphi 0, %s23
      %s26 = sphi 0, %s24
      %s36 = sphi 0, %s38
      %s39 = sphi 0, %s36
      %s40 = sphi 0, %s39
      %s56 = sphi 0, %s40
      %s60 = sphi 0, %s60
      %s62 = sphi 0, %s60
      %s63 = sphi 0, %s62
      %s77 = sphi 0, %s63
      %s81 = sphi 0, %s81
      %s83 = sphi 0, %s81
      %s84 = sphi 0, %s83
      %s98 = sphi 0, %s84
      %s104 = sphi 0, %s106
      %s107 = sphi 0, %s104
      %s108 = sphi 0, %s107
      %s124 = sphi 0, %s108
      %s130 = sphi 0, %s132
      %s133 = sphi 0, %s130
      %s134 = sphi 0, %s133
      %s150 = sphi 0, %s134
      %s158 = sphi 0, %s160
      %s161 = sphi 0, %s158
      %s162 = sphi 0, %s161
      %s178 = sphi 0, %s162
    $region4: #{diae_forward.3} parent=1 // loop_header_branch
      %17 = sbr.rel (%p15) target = $region8
    $region5: #{diae_forward.3} parent=1 // loop_body
      %s19 = ssub.s32 %s14, 1
      %s20 = ssub.s32 %s14, 2
      %s27 = sadd.s32 1, %s22
      %p28 = scmp.ge.s32.totalorder %s27, 2
      %s29 = scalar_select %p28, 0, %s27
      %s30 = sadd.s32 1, %s21
      %s31 = scalar_select %p28, %s30, %s21
      %p32 = scmp.ge.s32.totalorder %s31, 1
      %s33 = scalar_select %p32, 0, %s31
      %s34 = ssub.s32 %s21, %s33
      %p35 = scmp.eq.s32.totalorder %s34, 0
      %s37 = sadd.s32 %s36, 1
      %s38 = scalar_select %p35, %s36, %s37
      %p41 = pneg %p35
      %p42 = scmp.eq.s32.totalorder %s14, 1
      %p43 = por %p41, %p42
      %p44 = scmp.ne.s32.totalorder %s36, %s39
      %p45 = scmp.eq.s32.totalorder %s14, 0
      %p46 = por %p44, %p45
      %p47 = scmp.ne.s32.totalorder %s36, %s39
      %p48 = scmp.eq.s32.totalorder %s19, 1
      %p49 = por %p47, %p48
      %p50 = scmp.ne.s32.totalorder %s39, %s40
      %p51 = scmp.eq.s32.totalorder %s19, 0
      %p52 = por %p50, %p51
      %p53 = scmp.ne.s32.totalorder %s39, %s40
      %p54 = scmp.eq.s32.totalorder %s20, 1
      %p55 = por %p53, %p54
      %p57 = scmp.ne.s32.totalorder %s40, %s56
      %p58 = scmp.eq.s32.totalorder %s20, 0
      %p59 = por %p57, %p58
      %s61 = sadd.s32 %s60, 1
      %p64 = scmp.eq.s32.totalorder %s14, 1
      %p65 = scmp.ne.s32.totalorder %s60, %s62
      %p66 = scmp.eq.s32.totalorder %s14, 0
      %p67 = por %p65, %p66
      %p68 = scmp.ne.s32.totalorder %s60, %s62
      %p69 = scmp.eq.s32.totalorder %s19, 1
      %p70 = por %p68, %p69
      %p71 = scmp.ne.s32.totalorder %s62, %s63
      %p72 = scmp.eq.s32.totalorder %s19, 0
      %p73 = por %p71, %p72
      %p74 = scmp.ne.s32.totalorder %s62, %s63
      %p75 = scmp.eq.s32.totalorder %s20, 1
      %p76 = por %p74, %p75
      %p78 = scmp.ne.s32.totalorder %s63, %s77
      %p79 = scmp.eq.s32.totalorder %s20, 0
      %p80 = por %p78, %p79
      %s82 = sadd.s32 %s81, 1
      %p85 = scmp.eq.s32.totalorder %s14, 1
      %p86 = scmp.ne.s32.totalorder %s81, %s83
      %p87 = scmp.eq.s32.totalorder %s14, 0
      %p88 = por %p86, %p87
      %p89 = scmp.ne.s32.totalorder %s81, %s83
      %p90 = scmp.eq.s32.totalorder %s19, 1
      %p91 = por %p89, %p90
      %p92 = scmp.ne.s32.totalorder %s83, %s84
      %p93 = scmp.eq.s32.totalorder %s19, 0
      %p94 = por %p92, %p93
      %p95 = scmp.ne.s32.totalorder %s83, %s84
      %p96 = scmp.eq.s32.totalorder %s20, 1
      %p97 = por %p95, %p96
      %p99 = scmp.ne.s32.totalorder %s84, %s98
      %p100 = scmp.eq.s32.totalorder %s20, 0
      %p101 = por %p99, %p100
      %s102 = ssub.s32 %s22, %s29
      %p103 = scmp.eq.s32.totalorder %s102, 0
      %s105 = sadd.s32 %s104, 1
      %s106 = scalar_select %p103, %s104, %s105
      %p109 = pneg %p103
      %p110 = scmp.eq.s32.totalorder %s14, 1
      %p111 = por %p109, %p110
      %p112 = scmp.ne.s32.totalorder %s104, %s107
      %p113 = scmp.eq.s32.totalorder %s14, 0
      %p114 = por %p112, %p113
      %p115 = scmp.ne.s32.totalorder %s104, %s107
      %p116 = scmp.eq.s32.totalorder %s19, 1
      %p117 = por %p115, %p116
      %p118 = scmp.ne.s32.totalorder %s107, %s108
      %p119 = scmp.eq.s32.totalorder %s19, 0
      %p120 = por %p118, %p119
      %p121 = scmp.ne.s32.totalorder %s107, %s108
      %p122 = scmp.eq.s32.totalorder %s20, 1
      %p123 = por %p121, %p122
      %p125 = scmp.ne.s32.totalorder %s108, %s124
      %p126 = scmp.eq.s32.totalorder %s20, 0
      %p127 = por %p125, %p126
      %s128 = ssub.s32 %s22, %s29
      %p129 = scmp.eq.s32.totalorder %s128, 0
      %s131 = sadd.s32 %s130, 1
      %s132 = scalar_select %p129, %s130, %s131
      %p135 = pneg %p129
      %p136 = scmp.eq.s32.totalorder %s14, 1
      %p137 = por %p135, %p136
      %p138 = scmp.ne.s32.totalorder %s130, %s133
      %p139 = scmp.eq.s32.totalorder %s14, 0
      %p140 = por %p138, %p139
      %p141 = scmp.ne.s32.totalorder %s130, %s133
      %p142 = scmp.eq.s32.totalorder %s19, 1
      %p143 = por %p141, %p142
      %p144 = scmp.ne.s32.totalorder %s133, %s134
      %p145 = scmp.eq.s32.totalorder %s19, 0
      %p146 = por %p144, %p145
      %p147 = scmp.ne.s32.totalorder %s133, %s134
      %p148 = scmp.eq.s32.totalorder %s20, 1
      %p149 = por %p147, %p148
      %p151 = scmp.ne.s32.totalorder %s134, %s150
      %p152 = scmp.eq.s32.totalorder %s20, 0
      %p153 = por %p151, %p152
      %s154 = ssub.s32 %s21, %s33
      %s155 = ssub.s32 %s22, %s29
      %s156 = sor.u32 %s154, %s155
      %p157 = scmp.eq.s32.totalorder %s156, 0
      %s159 = sadd.s32 %s158, 1
      %s160 = scalar_select %p157, %s158, %s159
      %p163 = pneg %p157
      %p164 = scmp.eq.s32.totalorder %s14, 1
      %p165 = por %p163, %p164
      %p166 = scmp.ne.s32.totalorder %s158, %s161
      %p167 = scmp.eq.s32.totalorder %s14, 0
      %p168 = por %p166, %p167
      %p169 = scmp.ne.s32.totalorder %s158, %s161
      %p170 = scmp.eq.s32.totalorder %s19, 1
      %p171 = por %p169, %p170
      %p172 = scmp.ne.s32.totalorder %s161, %s162
      %p173 = scmp.eq.s32.totalorder %s19, 0
      %p174 = por %p172, %p173
      %p175 = scmp.ne.s32.totalorder %s161, %s162
      %p176 = scmp.eq.s32.totalorder %s20, 1
      %p177 = por %p175, %p176
      %p179 = scmp.ne.s32.totalorder %s162, %s178
      %p180 = scmp.eq.s32.totalorder %s20, 0
      %p181 = por %p179, %p180
      %p182 = scmp.le.s32.totalorder 1, %s14
      %p183 = scmp.lt.s32.totalorder %s14, 3
      %p184 = pnand %p182, %p183
      %p185 = pneg %p184
      // Predicated region
      $region9: #{diae_forward.3} parent=5 // pred_check
        _
      $region10: #{diae_forward.3} parent=5 // pred_check_branch
        %187 = sbr.rel (%p184) target = $region12
      $region11: #{diae_forward.3} parent=5 // pred_region
        %s188 = ssub.s32 %s14, 1
        // Predicated region
        $region13: #{diae_forward.3} parent=11 // pred_check
          %p189 = pneg %p52
        $region14: #{diae_forward.3} parent=11 // pred_check_branch
          %191 = sbr.rel (%p189) target = $region16
        $region15: #{diae_forward.3} parent=11 // pred_region
          %p192 = scmp.lt.s32.totalorder %s23, 0
          %s193 = scalar_select %p192, %s23, 0
          %s194 = smul.addr %s193, 4
          %s195 = scalar_lea.vmem %s0, %s194
        $region16: #{diae_forward.3} parent=11 // pred_fallthru
          _
        // Predicated region
        $region17: #{diae_forward.3} parent=11 // pred_check
          %p196 = pneg %p73
        $region18: #{diae_forward.3} parent=11 // pred_check_branch
          %198 = sbr.rel (%p196) target = $region20
        $region19: #{diae_forward.3} parent=11 // pred_region
          _
        $region20: #{diae_forward.3} parent=11 // pred_fallthru
          _
        // Predicated region
        $region21: #{diae_forward.3} parent=11 // pred_check
          %p199 = pneg %p94
        $region22: #{diae_forward.3} parent=11 // pred_check_branch
          %201 = sbr.rel (%p199) target = $region24
        $region23: #{diae_forward.3} parent=11 // pred_region
          _
        $region24: #{diae_forward.3} parent=11 // pred_fallthru
          _
      $region12: #{diae_forward.3} parent=5 // pred_fallthru
        _
      %p202 = scmp.lt.s32.totalorder %s14, 2
      // Predicated region
      $region25: #{diae_forward.3} parent=5 // pred_check
        %p203 = pneg %p202
      $region26: #{diae_forward.3} parent=5 // pred_check_branch
        %205 = sbr.rel (%p203) target = $region28
      $region27: #{diae_forward.3} parent=5 // pred_region
        // Predicated region
        $region29: #{diae_forward.3} parent=27 // pred_check
          %p206 = pneg %p114
        $region30: #{diae_forward.3} parent=27 // pred_check_branch
          %208 = sbr.rel (%p206) target = $region32
        $region31: #{diae_forward.3} parent=27 // pred_region
          %s209 = smul.u32 64, %s22
          %p210 = scmp.lt.s32.totalorder %s209, 127
          %s211 = scalar_select %p210, %s209, 127
          %s212 = smul.addr %s211, 2
          %s213 = smul.addr %s212, 4
          %s214 = scalar_lea.vmem %s3, %s213
          %s215 = smul.u32 64, %s22
        $region32: #{diae_forward.3} parent=27 // pred_fallthru
          _
        // Predicated region
        $region33: #{diae_forward.3} parent=27 // pred_check
          %p216 = pneg %p140
        $region34: #{diae_forward.3} parent=27 // pred_check_branch
          %218 = sbr.rel (%p216) target = $region36
        $region35: #{diae_forward.3} parent=27 // pred_region
          %s219 = smul.u32 4, %s22
          %p220 = scmp.lt.s32.totalorder %s219, 7
          %s221 = scalar_select %p220, %s219, 7
          %s222 = scalar_lea.vmem %s4, %s221
          %s223 = smul.u32 4, %s22
        $region36: #{diae_forward.3} parent=27 // pred_fallthru
          _
      $region28: #{diae_forward.3} parent=5 // pred_fallthru
        _
      %p224 = scmp.le.s32.totalorder 1, %s14
      %p225 = scmp.lt.s32.totalorder %s14, 3
      %p226 = pnand %p224, %p225
      %p227 = pneg %p226
      // Predicated region
      $region37: #{diae_forward.3} parent=5 // pred_check
        _
      $region38: #{diae_forward.3} parent=5 // pred_check_branch
        %229 = sbr.rel (%p226) target = $region40
      $region39: #{diae_forward.3} parent=5 // pred_region
        %s230 = ssub.s32 %s14, 1
        %p231 = scmp.lt.s32.totalorder %s23, 0
        %s232 = scalar_select %p231, %s23, 0
        %s233 = smul.addr %s232, 4
        %s234 = scalar_lea.vmem %s0, %s233
        %p235 = pneg %p52
        %p236 = pneg %p49
        %p237 = pneg %p73
        %p238 = pneg %p70
        %p239 = pneg %p94
        %p240 = pneg %p91
        %s241 = smul.u32 64, %s24
        %p242 = scmp.lt.s32.totalorder %s241, 127
        %s243 = scalar_select %p242, %s241, 127
        %s244 = smul.addr %s243, 2
        %s245 = smul.addr %s244, 4
        %s246 = scalar_lea.vmem %s3, %s245
        %p247 = pneg %p120
        %p248 = pneg %p117
        %s249 = smul.u32 4, %s24
        %p250 = scmp.lt.s32.totalorder %s249, 7
        %s251 = scalar_select %p250, %s249, 7
        %s252 = scalar_lea.vmem %s4, %s251
        %p253 = pneg %p146
        %p254 = pneg %p143
        %p255 = pneg %p174
        %p256 = pneg %p171
        %s257 = sand.u32 %s161, 1
        %s258 = scalar_lea.sflag [#allocation4], %s257
        %s259 = sand.u32 %s161, 1
        %s260 = smul.addr %s259, 32
        %s261 = scalar_lea.vmem [#allocation3], %s260
        %p262 = scmp.lt.s32.totalorder %s23, 0
        %s263 = scalar_select %p262, %s23, 0
        %s264 = smul.addr %s263, 4
        %s265 = scalar_lea.vmem %s0, %s264
        %s266 = smul.u32 64, %s24
        %p267 = scmp.lt.s32.totalorder %s266, 127
        %s268 = scalar_select %p267, %s266, 127
        %s269 = smul.addr %s268, 2
        %s270 = smul.addr %s269, 4
        %s271 = scalar_lea.vmem %s3, %s270
        %s272 = smul.u32 64, %s24
        %s273 = smul.u32 4, %s24
        %p274 = scmp.lt.s32.totalorder %s273, 7
        %s275 = scalar_select %p274, %s273, 7
        %s276 = scalar_lea.vmem %s4, %s275
        %s277 = smul.u32 4, %s24
        %s278 = smul.u32 4, %s24
        %p280 = scmp.eq.s32.totalorder %s24, 0
        // Predicated region
        $region41: #{diae_forward.3} parent=39 // pred_check
          %p281 = pneg %p280
        $region42: #{diae_forward.3} parent=39 // pred_check_branch
          %283 = sbr.rel (%p281) target = $region44
        $region43: #{diae_forward.3} parent=39 // pred_region
          %v284 = vld [vmem:[%s265] sm:$0xf]
          %v285 = vld [vmem:[%s1] sm:$0xf]
          %v286 = vld [vmem:[%s1 + $0x4] sm:$0xf]
          %v287 = vld [vmem:[%s1 + $0x8] sm:$0xf]
          %v288 = vld [vmem:[%s1 + $0xc] sm:$0xf]
          %v289 = vld [vmem:[%s1 + $0x10] sm:$0xf]
          %v290 = vld [vmem:[%s1 + $0x14] sm:$0xf]
          %v291 = vld [vmem:[%s1 + $0x18] sm:$0xf]
          %v292 = vld [vmem:[%s1 + $0x1c] sm:$0xf]
          %v293 = vld [vmem:[%s1 + $0x20] sm:$0xf]
          %v294 = vld [vmem:[%s1 + $0x24] sm:$0xf]
          %v295 = vld [vmem:[%s1 + $0x28] sm:$0xf]
          %v296 = vld [vmem:[%s1 + $0x2c] sm:$0xf]
          %v297 = vld [vmem:[%s1 + $0x30] sm:$0xf]
          %v298 = vld [vmem:[%s1 + $0x34] sm:$0xf]
          %v299 = vld [vmem:[%s1 + $0x38] sm:$0xf]
          %v300 = vld [vmem:[%s1 + $0x3c] sm:$0xf]
          %v301 = vld [vmem:[%s1 + $0x40] sm:$0xf]
          %v302 = vld [vmem:[%s1 + $0x44] sm:$0xf]
          %v303 = vld [vmem:[%s1 + $0x48] sm:$0xf]
          %v304 = vld [vmem:[%s1 + $0x4c] sm:$0xf]
          %v305 = vld [vmem:[%s1 + $0x50] sm:$0xf]
          %v306 = vld [vmem:[%s1 + $0x54] sm:$0xf]
          %v307 = vld [vmem:[%s1 + $0x58] sm:$0xf]
          %v308 = vld [vmem:[%s1 + $0x5c] sm:$0xf]
          %v309 = vld [vmem:[%s1 + $0x60] sm:$0xf]
          %v310 = vld [vmem:[%s1 + $0x64] sm:$0xf]
          %v311 = vld [vmem:[%s1 + $0x68] sm:$0xf]
          %v312 = vld [vmem:[%s1 + $0x6c] sm:$0xf]
          %v313 = vld [vmem:[%s1 + $0x70] sm:$0xf]
          %v314 = vld [vmem:[%s1 + $0x74] sm:$0xf]
          %v315 = vld [vmem:[%s1 + $0x78] sm:$0xf]
          %v316 = vld [vmem:[%s1 + $0x7c] sm:$0xf]
          %v317 = vld [vmem:[%s2] sm:$0x3]
          %v319 = vlaneseq
          %v320 = vshrl.u32 %v319, 7
          %v321 = vsub.s32 0, %v320
          %v322 = vrot.slane %v317, %v321
          %v323 = vlaneseq
          %v324 = vshrl.u32 %v323, 7
          %v325 = vsub.s32 1, %v324
          %v326 = vrot.slane %v317, %v325
          %v361 = vunpack.c.l.b16 %v285
          %v362 = vunpack.c.l.b16 %v286
          %v363 = vunpack.c.l.b16 %v287
          %v364 = vunpack.c.l.b16 %v288
          %v365 = vunpack.c.l.b16 %v289
          %v366 = vunpack.c.l.b16 %v290
          %v367 = vunpack.c.l.b16 %v291
          %v368 = vunpack.c.l.b16 %v292
          %v369 = vunpack.c.l.b16 %v293
          %v370 = vunpack.c.l.b16 %v294
          %v371 = vunpack.c.l.b16 %v295
          %v372 = vunpack.c.l.b16 %v296
          %v373 = vunpack.c.l.b16 %v297
          %v374 = vunpack.c.l.b16 %v298
          %v375 = vunpack.c.l.b16 %v299
          %v376 = vunpack.c.l.b16 %v300
          %v377 = vunpack.c.l.b16 %v301
          %v378 = vunpack.c.l.b16 %v302
          %v379 = vunpack.c.l.b16 %v303
          %v380 = vunpack.c.l.b16 %v304
          %v381 = vunpack.c.l.b16 %v305
          %v382 = vunpack.c.l.b16 %v306
          %v383 = vunpack.c.l.b16 %v307
          %v384 = vunpack.c.l.b16 %v308
          %v385 = vunpack.c.l.b16 %v309
          %v386 = vunpack.c.l.b16 %v310
          %v387 = vunpack.c.l.b16 %v311
          %v388 = vunpack.c.l.b16 %v312
          %v389 = vunpack.c.l.b16 %v313
          %v390 = vunpack.c.l.b16 %v314
          %v391 = vunpack.c.l.b16 %v315
          %v392 = vunpack.c.l.b16 %v316
          %v393 = vpack.c.b16 %v362, %v361
          %v394 = vpack.c.b16 %v364, %v363
          %v395 = vpack.c.b16 %v366, %v365
          %v396 = vpack.c.b16 %v368, %v367
          %v397 = vpack.c.b16 %v370, %v369
          %v398 = vpack.c.b16 %v372, %v371
          %v399 = vpack.c.b16 %v374, %v373
          %v400 = vpack.c.b16 %v376, %v375
          %v401 = vpack.c.b16 %v378, %v377
          %v402 = vpack.c.b16 %v380, %v379
          %v403 = vpack.c.b16 %v382, %v381
          %v404 = vpack.c.b16 %v384, %v383
          %v405 = vpack.c.b16 %v386, %v385
          %v406 = vpack.c.b16 %v388, %v387
          %v407 = vpack.c.b16 %v390, %v389
          %v408 = vpack.c.b16 %v392, %v391
          %425 = vmatprep.subr.bf16.mxu0 0
          %426 = vmatpush1.bf16.xpose.msra.mxu0 %v400
          %427 = vmatprep.subr.bf16.mxu0 0
          %428 = vmatpush1.bf16.xpose.msra.mxu0 %v399
          %429 = vmatprep.subr.bf16.mxu0 0
          %430 = vmatpush1.bf16.xpose.msra.mxu0 %v398
          %431 = vmatprep.subr.bf16.mxu0 0
          %432 = vmatpush1.bf16.xpose.msra.mxu0 %v397
          %433 = vmatprep.subr.bf16.mxu0 0
          %434 = vmatpush1.bf16.xpose.msra.mxu0 %v396
          %435 = vmatprep.subr.bf16.mxu0 0
          %436 = vmatpush1.bf16.xpose.msra.mxu0 %v395
          %437 = vmatprep.subr.bf16.mxu0 0
          %438 = vmatpush1.bf16.xpose.msra.mxu0 %v394
          %439 = vmatprep.subr.bf16.mxu0 0
          %440 = vmatpush1.bf16.xpose.msra.mxu0 %v393
          %441 = vmatprep.subr.bf16.mxu0 0
          %442 = vmatpush2.bf16.xpose.msra.mxu0 %v408
          %443 = vmatprep.subr.bf16.mxu0 0
          %444 = vmatpush2.bf16.xpose.msra.mxu0 %v407
          %445 = vmatprep.subr.bf16.mxu0 0
          %446 = vmatpush2.bf16.xpose.msra.mxu0 %v406
          %447 = vmatprep.subr.bf16.mxu0 0
          %448 = vmatpush2.bf16.xpose.msra.mxu0 %v405
          %449 = vmatprep.subr.bf16.mxu0 0
          %450 = vmatpush2.bf16.xpose.msra.mxu0 %v404
          %451 = vmatprep.subr.bf16.mxu0 0
          %452 = vmatpush2.bf16.xpose.msra.mxu0 %v403
          %453 = vmatprep.subr.bf16.mxu0 0
          %454 = vmatpush2.bf16.xpose.msra.mxu0 %v402
          %455 = vmatprep.subr.bf16.mxu0 0
          %456 = vmatpush2.bf16.xpose.msra.mxu0 %v401
          %457 = vmatprep.mubr.bf16.mxu0 0
          %458 = vmatmul.mubr.bf16.gmra.mxu0 %v284
          %v459 = vpop.f32.mrf.mxu0
          %v460 = vadd.f32 %v322, %v459
          %v461 = vpop.f32.mrf.mxu0
          %v462 = vadd.f32 %v326, %v461
          %v463 = vpop.f32.mrf.mxu0
          %v464 = vpop.f32.mrf.mxu0
          %465 = vdwg.mxu0
          %v466 = vxor.u32 %v460, 2147483648
          %v467 = vxor.u32 %v462, 2147483648
          %v468 = vmul.f32 %v466, 1.442695
          %v469 = vpow.pop %v468
          %v470 = vmul.f32 %v467, 1.442695
          %v471 = vpow.pop %v470
          %v472 = vadd.f32 %v469, 1.0
          %v473 = vadd.f32 %v471, 1.0
          %v474 = vrcp.pop %v472
          %v475 = vmul.f32 1.0, %v474
          %v476 = vrcp.pop %v473
          %v477 = vmul.f32 1.0, %v476
          %v478 = vpack.c.bf16 %v475, %v475
          %v479 = vpack.c.bf16 %v477, %v477
          %v482 = vunpack.c.l.b16 %v478
          %v483 = vunpack.c.l.b16 %v479
          %v484 = vpack.c.b16 %v483, %v482
          %486 = vst [vmem:[#allocation2] sm:$0xff] %v484
        $region44: #{diae_forward.3} parent=39 // pred_fallthru
          _
        %v487 = vld [vmem:[#allocation2] sm:$0xff]
        %v488 = vld [vmem:[%s271] sm:$0xff]
        %v489 = vld [vmem:[%s271 + $0x8] sm:$0xff]
        %v490 = vld [vmem:[%s271 + $0x10] sm:$0xff]
        %v491 = vld [vmem:[%s271 + $0x18] sm:$0xff]
        %v492 = vld [vmem:[%s271 + $0x20] sm:$0xff]
        %v493 = vld [vmem:[%s271 + $0x28] sm:$0xff]
        %v494 = vld [vmem:[%s271 + $0x30] sm:$0xff]
        %v495 = vld [vmem:[%s271 + $0x38] sm:$0xff]
        %v496 = vld [vmem:[%s271 + $0x40] sm:$0xff]
        %v497 = vld [vmem:[%s271 + $0x48] sm:$0xff]
        %v498 = vld [vmem:[%s271 + $0x50] sm:$0xff]
        %v499 = vld [vmem:[%s271 + $0x58] sm:$0xff]
        %v500 = vld [vmem:[%s271 + $0x60] sm:$0xff]
        %v501 = vld [vmem:[%s271 + $0x68] sm:$0xff]
        %v502 = vld [vmem:[%s271 + $0x70] sm:$0xff]
        %v503 = vld [vmem:[%s271 + $0x78] sm:$0xff]
        %v504 = vld [vmem:[%s271 + $0x80] sm:$0xff]
        %v505 = vld [vmem:[%s271 + $0x88] sm:$0xff]
        %v506 = vld [vmem:[%s271 + $0x90] sm:$0xff]
        %v507 = vld [vmem:[%s271 + $0x98] sm:$0xff]
        %v508 = vld [vmem:[%s271 + $0xa0] sm:$0xff]
        %v509 = vld [vmem:[%s271 + $0xa8] sm:$0xff]
        %v510 = vld [vmem:[%s271 + $0xb0] sm:$0xff]
        %v511 = vld [vmem:[%s271 + $0xb8] sm:$0xff]
        %v512 = vld [vmem:[%s271 + $0xc0] sm:$0xff]
        %v513 = vld [vmem:[%s271 + $0xc8] sm:$0xff]
        %v514 = vld [vmem:[%s271 + $0xd0] sm:$0xff]
        %v515 = vld [vmem:[%s271 + $0xd8] sm:$0xff]
        %v516 = vld [vmem:[%s271 + $0xe0] sm:$0xff]
        %v517 = vld [vmem:[%s271 + $0xe8] sm:$0xff]
        %v518 = vld [vmem:[%s271 + $0xf0] sm:$0xff]
        %v519 = vld [vmem:[%s271 + $0xf8] sm:$0xff]
        %v520 = vld [vmem:[%s271 + $0x100] sm:$0xff]
        %v521 = vld [vmem:[%s271 + $0x108] sm:$0xff]
        %v522 = vld [vmem:[%s271 + $0x110] sm:$0xff]
        %v523 = vld [vmem:[%s271 + $0x118] sm:$0xff]
        %v524 = vld [vmem:[%s271 + $0x120] sm:$0xff]
        %v525 = vld [vmem:[%s271 + $0x128] sm:$0xff]
        %v526 = vld [vmem:[%s271 + $0x130] sm:$0xff]
        %v527 = vld [vmem:[%s271 + $0x138] sm:$0xff]
        %v528 = vld [vmem:[%s271 + $0x140] sm:$0xff]
        %v529 = vld [vmem:[%s271 + $0x148] sm:$0xff]
        %v530 = vld [vmem:[%s271 + $0x150] sm:$0xff]
        %v531 = vld [vmem:[%s271 + $0x158] sm:$0xff]
        %v532 = vld [vmem:[%s271 + $0x160] sm:$0xff]
        %v533 = vld [vmem:[%s271 + $0x168] sm:$0xff]
        %v534 = vld [vmem:[%s271 + $0x170] sm:$0xff]
        %v535 = vld [vmem:[%s271 + $0x178] sm:$0xff]
        %v536 = vld [vmem:[%s271 + $0x180] sm:$0xff]
        %v537 = vld [vmem:[%s271 + $0x188] sm:$0xff]
        %v538 = vld [vmem:[%s271 + $0x190] sm:$0xff]
        %v539 = vld [vmem:[%s271 + $0x198] sm:$0xff]
        %v540 = vld [vmem:[%s271 + $0x1a0] sm:$0xff]
        %v541 = vld [vmem:[%s271 + $0x1a8] sm:$0xff]
        %v542 = vld [vmem:[%s271 + $0x1b0] sm:$0xff]
        %v543 = vld [vmem:[%s271 + $0x1b8] sm:$0xff]
        %v544 = vld [vmem:[%s271 + $0x1c0] sm:$0xff]
        %v545 = vld [vmem:[%s271 + $0x1c8] sm:$0xff]
        %v546 = vld [vmem:[%s271 + $0x1d0] sm:$0xff]
        %v547 = vld [vmem:[%s271 + $0x1d8] sm:$0xff]
        %v548 = vld [vmem:[%s271 + $0x1e0] sm:$0xff]
        %v549 = vld [vmem:[%s271 + $0x1e8] sm:$0xff]
        %v550 = vld [vmem:[%s271 + $0x1f0] sm:$0xff]
        %v551 = vld [vmem:[%s271 + $0x1f8] sm:$0xff]
        %v552 = vld [vmem:[%s276] sm:$0xf]
        %v554 = vlaneseq
        %v555 = vshrl.u32 %v554, 7
        %v556 = vsub.s32 0, %v555
        %v557 = vrot.slane %v552, %v556
        %v558 = vlaneseq
        %v559 = vshrl.u32 %v558, 7
        %v560 = vsub.s32 1, %v559
        %v561 = vrot.slane %v552, %v560
        %v562 = vlaneseq
        %v563 = vshrl.u32 %v562, 7
        %v564 = vsub.s32 2, %v563
        %v565 = vrot.slane %v552, %v564
        %v566 = vlaneseq
        %v567 = vshrl.u32 %v566, 7
        %v568 = vsub.s32 3, %v567
        %v569 = vrot.slane %v552, %v568
        %v575 = vunpack.c.l.b16 %v487
        %v576 = vunpack.c.h.b16 %v487
        %v577 = vpack.c.b16 %v575, %v575
        %v578 = vpack.c.b16 %v576, %v576
        %v645 = vunpack.c.l.b16 %v488
        %v646 = vunpack.c.h.b16 %v488
        %v647 = vunpack.c.l.b16 %v489
        %v648 = vunpack.c.h.b16 %v489
        %v649 = vunpack.c.l.b16 %v490
        %v650 = vunpack.c.h.b16 %v490
        %v651 = vunpack.c.l.b16 %v491
        %v652 = vunpack.c.h.b16 %v491
        %v653 = vunpack.c.l.b16 %v492
        %v654 = vunpack.c.h.b16 %v492
        %v655 = vunpack.c.l.b16 %v493
        %v656 = vunpack.c.h.b16 %v493
        %v657 = vunpack.c.l.b16 %v494
        %v658 = vunpack.c.h.b16 %v494
        %v659 = vunpack.c.l.b16 %v495
        %v660 = vunpack.c.h.b16 %v495
        %v661 = vunpack.c.l.b16 %v496
        %v662 = vunpack.c.h.b16 %v496
        %v663 = vunpack.c.l.b16 %v497
        %v664 = vunpack.c.h.b16 %v497
        %v665 = vunpack.c.l.b16 %v498
        %v666 = vunpack.c.h.b16 %v498
        %v667 = vunpack.c.l.b16 %v499
        %v668 = vunpack.c.h.b16 %v499
        %v669 = vunpack.c.l.b16 %v500
        %v670 = vunpack.c.h.b16 %v500
        %v671 = vunpack.c.l.b16 %v501
        %v672 = vunpack.c.h.b16 %v501
        %v673 = vunpack.c.l.b16 %v502
        %v674 = vunpack.c.h.b16 %v502
        %v675 = vunpack.c.l.b16 %v503
        %v676 = vunpack.c.h.b16 %v503
        %v677 = vunpack.c.l.b16 %v504
        %v678 = vunpack.c.h.b16 %v504
        %v679 = vunpack.c.l.b16 %v505
        %v680 = vunpack.c.h.b16 %v505
        %v681 = vunpack.c.l.b16 %v506
        %v682 = vunpack.c.h.b16 %v506
        %v683 = vunpack.c.l.b16 %v507
        %v684 = vunpack.c.h.b16 %v507
        %v685 = vunpack.c.l.b16 %v508
        %v686 = vunpack.c.h.b16 %v508
        %v687 = vunpack.c.l.b16 %v509
        %v688 = vunpack.c.h.b16 %v509
        %v689 = vunpack.c.l.b16 %v510
        %v690 = vunpack.c.h.b16 %v510
        %v691 = vunpack.c.l.b16 %v511
        %v692 = vunpack.c.h.b16 %v511
        %v693 = vunpack.c.l.b16 %v512
        %v694 = vunpack.c.h.b16 %v512
        %v695 = vunpack.c.l.b16 %v513
        %v696 = vunpack.c.h.b16 %v513
        %v697 = vunpack.c.l.b16 %v514
        %v698 = vunpack.c.h.b16 %v514
        %v699 = vunpack.c.l.b16 %v515
        %v700 = vunpack.c.h.b16 %v515
        %v701 = vunpack.c.l.b16 %v516
        %v702 = vunpack.c.h.b16 %v516
        %v703 = vunpack.c.l.b16 %v517
        %v704 = vunpack.c.h.b16 %v517
        %v705 = vunpack.c.l.b16 %v518
        %v706 = vunpack.c.h.b16 %v518
        %v707 = vunpack.c.l.b16 %v519
        %v708 = vunpack.c.h.b16 %v519
        %v709 = vunpack.c.l.b16 %v520
        %v710 = vunpack.c.h.b16 %v520
        %v711 = vunpack.c.l.b16 %v521
        %v712 = vunpack.c.h.b16 %v521
        %v713 = vunpack.c.l.b16 %v522
        %v714 = vunpack.c.h.b16 %v522
        %v715 = vunpack.c.l.b16 %v523
        %v716 = vunpack.c.h.b16 %v523
        %v717 = vunpack.c.l.b16 %v524
        %v718 = vunpack.c.h.b16 %v524
        %v719 = vunpack.c.l.b16 %v525
        %v720 = vunpack.c.h.b16 %v525
        %v721 = vunpack.c.l.b16 %v526
        %v722 = vunpack.c.h.b16 %v526
        %v723 = vunpack.c.l.b16 %v527
        %v724 = vunpack.c.h.b16 %v527
        %v725 = vunpack.c.l.b16 %v528
        %v726 = vunpack.c.h.b16 %v528
        %v727 = vunpack.c.l.b16 %v529
        %v728 = vunpack.c.h.b16 %v529
        %v729 = vunpack.c.l.b16 %v530
        %v730 = vunpack.c.h.b16 %v530
        %v731 = vunpack.c.l.b16 %v531
        %v732 = vunpack.c.h.b16 %v531
        %v733 = vunpack.c.l.b16 %v532
        %v734 = vunpack.c.h.b16 %v532
        %v735 = vunpack.c.l.b16 %v533
        %v736 = vunpack.c.h.b16 %v533
        %v737 = vunpack.c.l.b16 %v534
        %v738 = vunpack.c.h.b16 %v534
        %v739 = vunpack.c.l.b16 %v535
        %v740 = vunpack.c.h.b16 %v535
        %v741 = vunpack.c.l.b16 %v536
        %v742 = vunpack.c.h.b16 %v536
        %v743 = vunpack.c.l.b16 %v537
        %v744 = vunpack.c.h.b16 %v537
        %v745 = vunpack.c.l.b16 %v538
        %v746 = vunpack.c.h.b16 %v538
        %v747 = vunpack.c.l.b16 %v539
        %v748 = vunpack.c.h.b16 %v539
        %v749 = vunpack.c.l.b16 %v540
        %v750 = vunpack.c.h.b16 %v540
        %v751 = vunpack.c.l.b16 %v541
        %v752 = vunpack.c.h.b16 %v541
        %v753 = vunpack.c.l.b16 %v542
        %v754 = vunpack.c.h.b16 %v542
        %v755 = vunpack.c.l.b16 %v543
        %v756 = vunpack.c.h.b16 %v543
        %v757 = vunpack.c.l.b16 %v544
        %v758 = vunpack.c.h.b16 %v544
        %v759 = vunpack.c.l.b16 %v545
        %v760 = vunpack.c.h.b16 %v545
        %v761 = vunpack.c.l.b16 %v546
        %v762 = vunpack.c.h.b16 %v546
        %v763 = vunpack.c.l.b16 %v547
        %v764 = vunpack.c.h.b16 %v547
        %v765 = vunpack.c.l.b16 %v548
        %v766 = vunpack.c.h.b16 %v548
        %v767 = vunpack.c.l.b16 %v549
        %v768 = vunpack.c.h.b16 %v549
        %v769 = vunpack.c.l.b16 %v550
        %v770 = vunpack.c.h.b16 %v550
        %v771 = vunpack.c.l.b16 %v551
        %v772 = vunpack.c.h.b16 %v551
        %v773 = vpack.c.b16 %v647, %v645
        %v774 = vpack.c.b16 %v648, %v646
        %v775 = vpack.c.b16 %v651, %v649
        %v776 = vpack.c.b16 %v652, %v650
        %v777 = vpack.c.b16 %v655, %v653
        %v778 = vpack.c.b16 %v656, %v654
        %v779 = vpack.c.b16 %v659, %v657
        %v780 = vpack.c.b16 %v660, %v658
        %v781 = vpack.c.b16 %v663, %v661
        %v782 = vpack.c.b16 %v664, %v662
        %v783 = vpack.c.b16 %v667, %v665
        %v784 = vpack.c.b16 %v668, %v666
        %v785 = vpack.c.b16 %v671, %v669
        %v786 = vpack.c.b16 %v672, %v670
        %v787 = vpack.c.b16 %v675, %v673
        %v788 = vpack.c.b16 %v676, %v674
        %v789 = vpack.c.b16 %v679, %v677
        %v790 = vpack.c.b16 %v680, %v678
        %v791 = vpack.c.b16 %v683, %v681
        %v792 = vpack.c.b16 %v684, %v682
        %v793 = vpack.c.b16 %v687, %v685
        %v794 = vpack.c.b16 %v688, %v686
        %v795 = vpack.c.b16 %v691, %v689
        %v796 = vpack.c.b16 %v692, %v690
        %v797 = vpack.c.b16 %v695, %v693
        %v798 = vpack.c.b16 %v696, %v694
        %v799 = vpack.c.b16 %v699, %v697
        %v800 = vpack.c.b16 %v700, %v698
        %v801 = vpack.c.b16 %v703, %v701
        %v802 = vpack.c.b16 %v704, %v702
        %v803 = vpack.c.b16 %v707, %v705
        %v804 = vpack.c.b16 %v708, %v706
        %v805 = vpack.c.b16 %v711, %v709
        %v806 = vpack.c.b16 %v712, %v710
        %v807 = vpack.c.b16 %v715, %v713
        %v808 = vpack.c.b16 %v716, %v714
        %v809 = vpack.c.b16 %v719, %v717
        %v810 = vpack.c.b16 %v720, %v718
        %v811 = vpack.c.b16 %v723, %v721
        %v812 = vpack.c.b16 %v724, %v722
        %v813 = vpack.c.b16 %v727, %v725
        %v814 = vpack.c.b16 %v728, %v726
        %v815 = vpack.c.b16 %v731, %v729
        %v816 = vpack.c.b16 %v732, %v730
        %v817 = vpack.c.b16 %v735, %v733
        %v818 = vpack.c.b16 %v736, %v734
        %v819 = vpack.c.b16 %v739, %v737
        %v820 = vpack.c.b16 %v740, %v738
        %v821 = vpack.c.b16 %v743, %v741
        %v822 = vpack.c.b16 %v744, %v742
        %v823 = vpack.c.b16 %v747, %v745
        %v824 = vpack.c.b16 %v748, %v746
        %v825 = vpack.c.b16 %v751, %v749
        %v826 = vpack.c.b16 %v752, %v750
        %v827 = vpack.c.b16 %v755, %v753
        %v828 = vpack.c.b16 %v756, %v754
        %v829 = vpack.c.b16 %v759, %v757
        %v830 = vpack.c.b16 %v760, %v758
        %v831 = vpack.c.b16 %v763, %v761
        %v832 = vpack.c.b16 %v764, %v762
        %v833 = vpack.c.b16 %v767, %v765
        %v834 = vpack.c.b16 %v768, %v766
        %v835 = vpack.c.b16 %v771, %v769
        %v836 = vpack.c.b16 %v772, %v770
        %901 = vmatprep.subr.bf16.mxu0 %v788
        %902 = vmatpush1.bf16.xpose.msra.mxu0 %v787
        %903 = vmatprep.subr.bf16.mxu0 %v786
        %904 = vmatpush1.bf16.xpose.msra.mxu0 %v785
        %905 = vmatprep.subr.bf16.mxu0 %v784
        %906 = vmatpush1.bf16.xpose.msra.mxu0 %v783
        %907 = vmatprep.subr.bf16.mxu0 %v782
        %908 = vmatpush1.bf16.xpose.msra.mxu0 %v781
        %909 = vmatprep.subr.bf16.mxu0 %v780
        %910 = vmatpush1.bf16.xpose.msra.mxu0 %v779
        %911 = vmatprep.subr.bf16.mxu0 %v778
        %912 = vmatpush1.bf16.xpose.msra.mxu0 %v777
        %913 = vmatprep.subr.bf16.mxu0 %v776
        %914 = vmatpush1.bf16.xpose.msra.mxu0 %v775
        %915 = vmatprep.subr.bf16.mxu0 %v774
        %916 = vmatpush1.bf16.xpose.msra.mxu0 %v773
        %917 = vmatprep.subr.bf16.mxu0 %v804
        %918 = vmatpush2.bf16.xpose.msra.mxu0 %v803
        %919 = vmatprep.subr.bf16.mxu0 %v802
        %920 = vmatpush2.bf16.xpose.msra.mxu0 %v801
        %921 = vmatprep.subr.bf16.mxu0 %v800
        %922 = vmatpush2.bf16.xpose.msra.mxu0 %v799
        %923 = vmatprep.subr.bf16.mxu0 %v798
        %924 = vmatpush2.bf16.xpose.msra.mxu0 %v797
        %925 = vmatprep.subr.bf16.mxu0 %v796
        %926 = vmatpush2.bf16.xpose.msra.mxu0 %v795
        %927 = vmatprep.subr.bf16.mxu0 %v794
        %928 = vmatpush2.bf16.xpose.msra.mxu0 %v793
        %929 = vmatprep.subr.bf16.mxu0 %v792
        %930 = vmatpush2.bf16.xpose.msra.mxu0 %v791
        %931 = vmatprep.subr.bf16.mxu0 %v790
        %932 = vmatpush2.bf16.xpose.msra.mxu0 %v789
        %933 = vmatprep.mubr.bf16.mxu0 %v578
        %934 = vmatmul.mubr.bf16.gmra.mxu0 %v577
        %v935 = vpop.f32.mrf.mxu0
        %v936 = vadd.f32 %v557, %v935
        %v937 = vpop.f32.mrf.mxu0
        %v938 = vadd.f32 %v561, %v937
        %v939 = vpop.f32.mrf.mxu0
        %v940 = vpop.f32.mrf.mxu0
        %941 = vdwg.mxu0
        %942 = vmatprep.subr.bf16.mxu0 %v820
        %943 = vmatpush1.bf16.xpose.msra.mxu0 %v819
        %944 = vmatprep.subr.bf16.mxu0 %v818
        %945 = vmatpush1.bf16.xpose.msra.mxu0 %v817
        %946 = vmatprep.subr.bf16.mxu0 %v816
        %947 = vmatpush1.bf16.xpose.msra.mxu0 %v815
        %948 = vmatprep.subr.bf16.mxu0 %v814
        %949 = vmatpush1.bf16.xpose.msra.mxu0 %v813
        %950 = vmatprep.subr.bf16.mxu0 %v812
        %951 = vmatpush1.bf16.xpose.msra.mxu0 %v811
        %952 = vmatprep.subr.bf16.mxu0 %v810
        %953 = vmatpush1.bf16.xpose.msra.mxu0 %v809
        %954 = vmatprep.subr.bf16.mxu0 %v808
        %955 = vmatpush1.bf16.xpose.msra.mxu0 %v807
        %956 = vmatprep.subr.bf16.mxu0 %v806
        %957 = vmatpush1.bf16.xpose.msra.mxu0 %v805
        %958 = vmatprep.subr.bf16.mxu0 %v836
        %959 = vmatpush2.bf16.xpose.msra.mxu0 %v835
        %960 = vmatprep.subr.bf16.mxu0 %v834
        %961 = vmatpush2.bf16.xpose.msra.mxu0 %v833
        %962 = vmatprep.subr.bf16.mxu0 %v832
        %963 = vmatpush2.bf16.xpose.msra.mxu0 %v831
        %964 = vmatprep.subr.bf16.mxu0 %v830
        %965 = vmatpush2.bf16.xpose.msra.mxu0 %v829
        %966 = vmatprep.subr.bf16.mxu0 %v828
        %967 = vmatpush2.bf16.xpose.msra.mxu0 %v827
        %968 = vmatprep.subr.bf16.mxu0 %v826
        %969 = vmatpush2.bf16.xpose.msra.mxu0 %v825
        %970 = vmatprep.subr.bf16.mxu0 %v824
        %971 = vmatpush2.bf16.xpose.msra.mxu0 %v823
        %972 = vmatprep.subr.bf16.mxu0 %v822
        %973 = vmatpush2.bf16.xpose.msra.mxu0 %v821
        %974 = vmatprep.mubr.bf16.mxu0 %v578
        %975 = vmatmul.mubr.bf16.gmra.mxu0 %v577
        %v976 = vpop.f32.mrf.mxu0
        %v977 = vadd.f32 %v565, %v976
        %v978 = vpop.f32.mrf.mxu0
        %v979 = vadd.f32 %v569, %v978
        %v980 = vpop.f32.mrf.mxu0
        %v981 = vpop.f32.mrf.mxu0
        %982 = vdwg.mxu0
        %983 = vst [vmem:[%s261] sm:$0xff] %v936
        %984 = vst [vmem:[%s261 + $0x8] sm:$0xff] %v938
        %985 = vst [vmem:[%s261 + $0x10] sm:$0xff] %v977
        %986 = vst [vmem:[%s261 + $0x18] sm:$0xff] %v979
        %s987 = sand.u32 %s161, 1
        %s988 = scalar_lea.sflag [#allocation4], %s987
        %s989 = sand.u32 %s161, 1
        %s990 = smul.addr %s989, 32
        %s991 = scalar_lea.vmem [#allocation3], %s990
        // Predicated region
        $region45: #{diae_forward.3} parent=39 // pred_check
          %p992 = pneg %p171
        $region46: #{diae_forward.3} parent=39 // pred_check_branch
          %994 = sbr.rel (%p992) target = $region48
        $region47: #{diae_forward.3} parent=39 // pred_region
          %s995 = smul.u32 4, %s24
          %s997 = ssub.s32 512, 512
          %998 = vsyncadd %s988, %s997
          %s999 = smul.addr %s23, 8
          %s1000 = sadd.s32 %s995, %s999
          %s1001 = smul.addr %s1000, 128
          %s1002 = scalar_lea.hbm %s5, %s1001
          %s1004 = sshll.u32 %s991, 4
          %s1005 = int_to_ptr.vmem [resolvable:$true] %s1004
          %1007 = dma.vmem_to_hbm [thread:$0]  %s1005, 512, %s1002, %s988
        $region48: #{diae_forward.3} parent=39 // pred_fallthru
          _
      $region40: #{diae_forward.3} parent=5 // pred_fallthru
        _
      %p1008 = scmp.le.s32.totalorder 2, %s14
      // Predicated region
      $region49: #{diae_forward.3} parent=5 // pred_check
        %p1009 = pneg %p1008
      $region50: #{diae_forward.3} parent=5 // pred_check_branch
        %1011 = sbr.rel (%p1009) target = $region52
      $region51: #{diae_forward.3} parent=5 // pred_region
        %s1012 = ssub.s32 %s14, 2
        // Predicated region
        $region53: #{diae_forward.3} parent=51 // pred_check
          %p1013 = pneg %p177
        $region54: #{diae_forward.3} parent=51 // pred_check_branch
          %1015 = sbr.rel (%p1013) target = $region56
        $region55: #{diae_forward.3} parent=51 // pred_region
          %s1016 = sand.u32 %s162, 1
          %s1017 = scalar_lea.sflag [#allocation4], %s1016
          %s1018 = sand.u32 %s162, 1
          %s1019 = smul.addr %s1018, 32
          %s1020 = scalar_lea.vmem [#allocation3], %s1019
          %1021 = dma.done %s1017, 512
        $region56: #{diae_forward.3} parent=51 // pred_fallthru
          _
      $region52: #{diae_forward.3} parent=5 // pred_fallthru
        _
    $region6: #{diae_forward.3} parent=1 // loop_footer
      %s18 = sadd.s32 1, %s14
    $region7: #{diae_forward.3} parent=1 // loop_footer_branch
      %13 = sbr.rel target = $region3
    $region8: #{diae_forward.3} parent=1 // loop_exit
      _
    %1022 = vsyncpa [#allocation4], 1
    %s1023 = scalar_lea.sflag [#allocation4], 1
    %1024 = vsyncpa %s1023, 1

// kernel: diae_forward.2
$region0: #{diae_forward.2}
  #allocation0 [shape = 'u32[]', space=smem, size = 0x4, offset = 0x4, fixed_abs, tag = 'smem constant byte address 0x4 - core index']
  #allocation1 [shape = 'u32[144,128]{1,0:T(1,128)}', space=vmem, size = 0x12000, scoped, tag = 'internal scratch']
  #allocation2 [shape = 'f32[8,256]{1,0:T(8,128)}', space=vmem, size = 0x2000, scoped, tag = 'scratch operand']
  %s0 = inlined_call_operand.vmem [shape: bf16[8,1024], index: 0, kind: input, shape index: {}]
  %s1 = inlined_call_operand.hbm [shape: bf16[1024,256], index: 1, kind: input, shape index: {}]
  %s2 = inlined_call_operand.vmem [shape: f32[1,256], index: 2, kind: input, shape index: {}]
  %s3 = inlined_call_operand.hbm [shape: bf16[128,256], index: 3, kind: input, shape index: {}]
  %s4 = inlined_call_operand.vmem [shape: f32[1,128], index: 4, kind: input, shape index: {}]
  %s5 = inlined_call_operand.vmem [shape: bf16[8,128], index: 5, kind: output, shape index: {}]
  %s6 = sld [smem:[#allocation0]]
  $region69: #{diae_forward.2} parent=0
    _
  %s8 = ssub.s32 1, %s6
  %s9 = scalar_select 0, %s8, %s6
  $region1: #{diae_forward.2} parent=0
    #allocation3 [shape = 'u8[524288]{0}', space=vmem, size = 0x80000, scoped, tag = 'input window, operand 1']
    #allocation4 [shape = 's32[2]{0}', space=sflag, size = 0x8, scoped, tag = 'scoped memory for diae_forward.2']
    #allocation5 [shape = 'u8[65536]{0}', space=vmem, size = 0x10000, scoped, tag = 'input window, operand 3, single buffered']
    #allocation6 [shape = 's32[1]{0}', space=sflag, size = 0x4, scoped, tag = 'scoped memory for diae_forward.2']
    %10 = vsyncpa [#allocation4], 0
    %s11 = scalar_lea.sflag [#allocation4], 1
    %12 = vsyncpa %s11, 0
    %13 = vsyncpa [#allocation6], 0
    loop: start=0, step=1, limit=4
    $region2: #{diae_forward.2} parent=1 // loop_pre_header
      _
    $region3: #{diae_forward.2} parent=1 // loop_header
      %s15 = sphi 0, %s19
      %p16 = scmp.ge.s32.totalorder %s15, 4
      %s22 = sphi 0, %s34
      %s23 = sphi 0, %s30
      %s24 = sphi 0, %s22
      %s25 = sphi 0, %s23
      %s26 = sphi 0, %s24
      %s27 = sphi 0, %s25
      %s39 = sphi 0, %s41
      %s42 = sphi 0, %s39
      %s43 = sphi 0, %s42
      %s59 = sphi 0, %s43
      %s65 = sphi 0, %s67
      %s68 = sphi 0, %s65
      %s69 = sphi 0, %s68
      %s85 = sphi 0, %s69
      %s89 = sphi 0, %s89
      %s91 = sphi 0, %s89
      %s92 = sphi 0, %s91
      %s106 = sphi 0, %s92
      %s110 = sphi 0, %s110
      %s112 = sphi 0, %s110
      %s113 = sphi 0, %s112
      %s127 = sphi 0, %s113
      %s131 = sphi 0, %s131
      %s133 = sphi 0, %s131
      %s134 = sphi 0, %s133
      %s148 = sphi 0, %s134
      %s154 = sphi 0, %s156
      %s157 = sphi 0, %s154
      %s158 = sphi 0, %s157
      %s174 = sphi 0, %s158
    $region4: #{diae_forward.2} parent=1 // loop_header_branch
      %18 = sbr.rel (%p16) target = $region8
    $region5: #{diae_forward.2} parent=1 // loop_body
      %s20 = ssub.s32 %s15, 1
      %s21 = ssub.s32 %s15, 2
      %s28 = sadd.s32 1, %s23
      %p29 = scmp.ge.s32.totalorder %s28, 2
      %s30 = scalar_select %p29, 0, %s28
      %s31 = sadd.s32 1, %s22
      %s32 = scalar_select %p29, %s31, %s22
      %p33 = scmp.ge.s32.totalorder %s32, 1
      %s34 = scalar_select %p33, 0, %s32
      %s35 = ssub.s32 %s22, %s34
      %s36 = ssub.s32 %s23, %s30
      %s37 = sor.u32 %s35, %s36
      %p38 = scmp.eq.s32.totalorder %s37, 0
      %s40 = sadd.s32 %s39, 1
      %s41 = scalar_select %p38, %s39, %s40
      %p44 = pneg %p38
      %p45 = scmp.eq.s32.totalorder %s15, 1
      %p46 = por %p44, %p45
      %p47 = scmp.ne.s32.totalorder %s39, %s42
      %p48 = scmp.eq.s32.totalorder %s15, 0
      %p49 = por %p47, %p48
      %p50 = scmp.ne.s32.totalorder %s39, %s42
      %p51 = scmp.eq.s32.totalorder %s20, 1
      %p52 = por %p50, %p51
      %p53 = scmp.ne.s32.totalorder %s42, %s43
      %p54 = scmp.eq.s32.totalorder %s20, 0
      %p55 = por %p53, %p54
      %p56 = scmp.ne.s32.totalorder %s42, %s43
      %p57 = scmp.eq.s32.totalorder %s21, 1
      %p58 = por %p56, %p57
      %p60 = scmp.ne.s32.totalorder %s43, %s59
      %p61 = scmp.eq.s32.totalorder %s21, 0
      %p62 = por %p60, %p61
      %s63 = ssub.s32 %s23, %s30
      %p64 = scmp.eq.s32.totalorder %s63, 0
      %s66 = sadd.s32 %s65, 1
      %s67 = scalar_select %p64, %s65, %s66
      %p70 = pneg %p64
      %p71 = scmp.eq.s32.totalorder %s15, 1
      %p72 = por %p70, %p71
      %p73 = scmp.ne.s32.totalorder %s65, %s68
      %p74 = scmp.eq.s32.totalorder %s15, 0
      %p75 = por %p73, %p74
      %p76 = scmp.ne.s32.totalorder %s65, %s68
      %p77 = scmp.eq.s32.totalorder %s20, 1
      %p78 = por %p76, %p77
      %p79 = scmp.ne.s32.totalorder %s68, %s69
      %p80 = scmp.eq.s32.totalorder %s20, 0
      %p81 = por %p79, %p80
      %p82 = scmp.ne.s32.totalorder %s68, %s69
      %p83 = scmp.eq.s32.totalorder %s21, 1
      %p84 = por %p82, %p83
      %p86 = scmp.ne.s32.totalorder %s69, %s85
      %p87 = scmp.eq.s32.totalorder %s21, 0
      %p88 = por %p86, %p87
      %s90 = sadd.s32 %s89, 1
      %p93 = scmp.eq.s32.totalorder %s15, 1
      %p94 = scmp.ne.s32.totalorder %s89, %s91
      %p95 = scmp.eq.s32.totalorder %s15, 0
      %p96 = por %p94, %p95
      %p97 = scmp.ne.s32.totalorder %s89, %s91
      %p98 = scmp.eq.s32.totalorder %s20, 1
      %p99 = por %p97, %p98
      %p100 = scmp.ne.s32.totalorder %s91, %s92
      %p101 = scmp.eq.s32.totalorder %s20, 0
      %p102 = por %p100, %p101
      %p103 = scmp.ne.s32.totalorder %s91, %s92
      %p104 = scmp.eq.s32.totalorder %s21, 1
      %p105 = por %p103, %p104
      %p107 = scmp.ne.s32.totalorder %s92, %s106
      %p108 = scmp.eq.s32.totalorder %s21, 0
      %p109 = por %p107, %p108
      %s111 = sadd.s32 %s110, 1
      %p114 = scmp.eq.s32.totalorder %s15, 1
      %p115 = scmp.ne.s32.totalorder %s110, %s112
      %p116 = scmp.eq.s32.totalorder %s15, 0
      %p117 = por %p115, %p116
      %p118 = scmp.ne.s32.totalorder %s110, %s112
      %p119 = scmp.eq.s32.totalorder %s20, 1
      %p120 = por %p118, %p119
      %p121 = scmp.ne.s32.totalorder %s112, %s113
      %p122 = scmp.eq.s32.totalorder %s20, 0
      %p123 = por %p121, %p122
      %p124 = scmp.ne.s32.totalorder %s112, %s113
      %p125 = scmp.eq.s32.totalorder %s21, 1
      %p126 = por %p124, %p125
      %p128 = scmp.ne.s32.totalorder %s113, %s127
      %p129 = scmp.eq.s32.totalorder %s21, 0
      %p130 = por %p128, %p129
      %s132 = sadd.s32 %s131, 1
      %p135 = scmp.eq.s32.totalorder %s15, 1
      %p136 = scmp.ne.s32.totalorder %s131, %s133
      %p137 = scmp.eq.s32.totalorder %s15, 0
      %p138 = por %p136, %p137
      %p139 = scmp.ne.s32.totalorder %s131, %s133
      %p140 = scmp.eq.s32.totalorder %s20, 1
      %p141 = por %p139, %p140
      %p142 = scmp.ne.s32.totalorder %s133, %s134
      %p143 = scmp.eq.s32.totalorder %s20, 0
      %p144 = por %p142, %p143
      %p145 = scmp.ne.s32.totalorder %s133, %s134
      %p146 = scmp.eq.s32.totalorder %s21, 1
      %p147 = por %p145, %p146
      %p149 = scmp.ne.s32.totalorder %s134, %s148
      %p150 = scmp.eq.s32.totalorder %s21, 0
      %p151 = por %p149, %p150
      %s152 = ssub.s32 %s22, %s34
      %p153 = scmp.eq.s32.totalorder %s152, 0
      %s155 = sadd.s32 %s154, 1
      %s156 = scalar_select %p153, %s154, %s155
      %p159 = pneg %p153
      %p160 = scmp.eq.s32.totalorder %s15, 1
      %p161 = por %p159, %p160
      %p162 = scmp.ne.s32.totalorder %s154, %s157
      %p163 = scmp.eq.s32.totalorder %s15, 0
      %p164 = por %p162, %p163
      %p165 = scmp.ne.s32.totalorder %s154, %s157
      %p166 = scmp.eq.s32.totalorder %s20, 1
      %p167 = por %p165, %p166
      %p168 = scmp.ne.s32.totalorder %s157, %s158
      %p169 = scmp.eq.s32.totalorder %s20, 0
      %p170 = por %p168, %p169
      %p171 = scmp.ne.s32.totalorder %s157, %s158
      %p172 = scmp.eq.s32.totalorder %s21, 1
      %p173 = por %p171, %p172
      %p175 = scmp.ne.s32.totalorder %s158, %s174
      %p176 = scmp.eq.s32.totalorder %s21, 0
      %p177 = por %p175, %p176
      %p178 = scmp.le.s32.totalorder 1, %s15
      %p179 = scmp.lt.s32.totalorder %s15, 3
      %p180 = pnand %p178, %p179
      %p181 = pneg %p180
      // Predicated region
      $region9: #{diae_forward.2} parent=5 // pred_check
        _
      $region10: #{diae_forward.2} parent=5 // pred_check_branch
        %183 = sbr.rel (%p180) target = $region12
      $region11: #{diae_forward.2} parent=5 // pred_region
        %s184 = ssub.s32 %s15, 1
        // Predicated region
        $region13: #{diae_forward.2} parent=11 // pred_check
          %p185 = pneg %p102
        $region14: #{diae_forward.2} parent=11 // pred_check_branch
          %187 = sbr.rel (%p185) target = $region16
        $region15: #{diae_forward.2} parent=11 // pred_region
          _
        $region16: #{diae_forward.2} parent=11 // pred_fallthru
          _
        // Predicated region
        $region17: #{diae_forward.2} parent=11 // pred_check
          %p188 = pneg %p123
        $region18: #{diae_forward.2} parent=11 // pred_check_branch
          %190 = sbr.rel (%p188) target = $region20
        $region19: #{diae_forward.2} parent=11 // pred_region
          %s192 = ssub.s32 2048, 2048
          %193 = vsyncadd [#allocation6], %s192
          %s194 = sshll.u32 [#allocation5], 4
          %s195 = int_to_ptr.vmem [resolvable:$true] %s194
          %200 = dma.hbm_to_vmem [thread:$0]  %s3, 2048, %s195, [#allocation6], 128, 128, 8
        $region20: #{diae_forward.2} parent=11 // pred_fallthru
          _
        // Predicated region
        $region21: #{diae_forward.2} parent=11 // pred_check
          %p201 = pneg %p144
        $region22: #{diae_forward.2} parent=11 // pred_check_branch
          %203 = sbr.rel (%p201) target = $region24
        $region23: #{diae_forward.2} parent=11 // pred_region
          _
        $region24: #{diae_forward.2} parent=11 // pred_fallthru
          _
      $region12: #{diae_forward.2} parent=5 // pred_fallthru
        _
      %p204 = scmp.lt.s32.totalorder %s15, 2
      // Predicated region
      $region25: #{diae_forward.2} parent=5 // pred_check
        %p205 = pneg %p204
      $region26: #{diae_forward.2} parent=5 // pred_check_branch
        %207 = sbr.rel (%p205) target = $region28
      $region27: #{diae_forward.2} parent=5 // pred_region
        // Predicated region
        $region29: #{diae_forward.2} parent=27 // pred_check
          %p208 = pneg %p49
        $region30: #{diae_forward.2} parent=27 // pred_check_branch
          %210 = sbr.rel (%p208) target = $region32
        $region31: #{diae_forward.2} parent=27 // pred_region
          %s211 = smul.u32 4, %s23
          %p212 = scmp.lt.s32.totalorder %s22, 0
          %s213 = scalar_select %p212, %s22, 0
          %p214 = scmp.lt.s32.totalorder %s211, 7
          %s215 = scalar_select %p214, %s211, 7
          %s216 = smul.addr %s213, 8
          %s217 = sadd.s32 %s215, %s216
          %s218 = smul.addr %s217, 4
          %s219 = scalar_lea.vmem %s0, %s218
          %s220 = smul.u32 4, %s23
        $region32: #{diae_forward.2} parent=27 // pred_fallthru
          _
        // Predicated region
        $region33: #{diae_forward.2} parent=27 // pred_check
          %p221 = pneg %p75
        $region34: #{diae_forward.2} parent=27 // pred_check_branch
          %223 = sbr.rel (%p221) target = $region36
        $region35: #{diae_forward.2} parent=27 // pred_region
          %s224 = sand.u32 %s65, 1
          %s225 = scalar_lea.sflag [#allocation4], %s224
          %s226 = sand.u32 %s65, 1
          %s227 = smul.addr %s226, 512
          %s228 = scalar_lea.vmem [#allocation3], %s227
          %s229 = smul.u32 64, %s23
          %s231 = ssub.s32 8192, 8192
          %232 = vsyncadd %s225, %s231
          %s233 = smul.addr %s229, 2
          %s234 = smul.addr %s233, 64
          %s235 = scalar_lea.hbm %s1, %s234
          %s236 = sshll.u32 %s228, 4
          %s237 = int_to_ptr.vmem [resolvable:$true] %s236
          %242 = dma.hbm_to_vmem [thread:$0]  %s235, 8192, %s237, %s225, 128, 128, 8
        $region36: #{diae_forward.2} parent=27 // pred_fallthru
          _
      $region28: #{diae_forward.2} parent=5 // pred_fallthru
        _
      %p243 = scmp.le.s32.totalorder 1, %s15
      %p244 = scmp.lt.s32.totalorder %s15, 3
      %p245 = pnand %p243, %p244
      %p246 = pneg %p245
      // Predicated region
      $region37: #{diae_forward.2} parent=5 // pred_check
        _
      $region38: #{diae_forward.2} parent=5 // pred_check_branch
        %248 = sbr.rel (%p245) target = $region40
      $region39: #{diae_forward.2} parent=5 // pred_region
        %s249 = ssub.s32 %s15, 1
        %s250 = sand.u32 %s68, 1
        %s251 = scalar_lea.sflag [#allocation4], %s250
        %s252 = sand.u32 %s68, 1
        %s253 = smul.addr %s252, 512
        %s254 = scalar_lea.vmem [#allocation3], %s253
        // Predicated region
        $region41: #{diae_forward.2} parent=39 // pred_check
          %p255 = pneg %p81
        $region42: #{diae_forward.2} parent=39 // pred_check_branch
          %257 = sbr.rel (%p255) target = $region44
        $region43: #{diae_forward.2} parent=39 // pred_region
          %258 = dma.done %s251, 8192
        $region44: #{diae_forward.2} parent=39 // pred_fallthru
          _
        // Predicated region
        $region45: #{diae_forward.2} parent=39 // pred_check
          %p259 = pneg %p123
        $region46: #{diae_forward.2} parent=39 // pred_check_branch
          %261 = sbr.rel (%p259) target = $region48
        $region47: #{diae_forward.2} parent=39 // pred_region
          %262 = dma.done [#allocation6], 2048
        $region48: #{diae_forward.2} parent=39 // pred_fallthru
          _
        %s263 = smul.u32 4, %s25
        %p264 = scmp.lt.s32.totalorder %s24, 0
        %s265 = scalar_select %p264, %s24, 0
        %p266 = scmp.lt.s32.totalorder %s263, 7
        %s267 = scalar_select %p266, %s263, 7
        %s268 = smul.addr %s265, 8
        %s269 = sadd.s32 %s267, %s268
        %s270 = smul.addr %s269, 4
        %s271 = scalar_lea.vmem %s0, %s270
        %p272 = pneg %p55
        %p273 = pneg %p52
        %s274 = sand.u32 %s68, 1
        %s275 = scalar_lea.sflag [#allocation4], %s274
        %s276 = sand.u32 %s68, 1
        %s277 = smul.addr %s276, 512
        %s278 = scalar_lea.vmem [#allocation3], %s277
        %p279 = pneg %p81
        %p280 = pneg %p78
        %p281 = pneg %p102
        %p282 = pneg %p99
        %p283 = pneg %p123
        %p284 = pneg %p120
        %p285 = pneg %p144
        %p286 = pneg %p141
        %p287 = pneg %p170
        %p288 = pneg %p167
        %p289 = scmp.lt.s32.totalorder %s24, 0
        %s290 = scalar_select %p289, %s24, 0
        %s291 = smul.addr %s290, 4
        %s292 = scalar_lea.vmem %s5, %s291
        %s293 = smul.u32 4, %s25
        %p294 = scmp.lt.s32.totalorder %s24, 0
        %s295 = scalar_select %p294, %s24, 0
        %p296 = scmp.lt.s32.totalorder %s293, 7
        %s297 = scalar_select %p296, %s293, 7
        %s298 = smul.addr %s295, 8
        %s299 = sadd.s32 %s297, %s298
        %s300 = smul.addr %s299, 4
        %s301 = scalar_lea.vmem %s0, %s300
        %s302 = smul.u32 4, %s25
        %s303 = smul.u32 64, %s25
        %p304 = scmp.lt.s32.totalorder %s24, 0
        %s305 = scalar_select %p304, %s24, 0
        %s306 = smul.addr %s305, 4
        %s307 = scalar_lea.vmem %s5, %s306
        %p309 = scmp.eq.s32.totalorder %s25, 0
        // Predicated region
        $region49: #{diae_forward.2} parent=39 // pred_check
          %p310 = pneg %p309
        $region50: #{diae_forward.2} parent=39 // pred_check_branch
          %312 = sbr.rel (%p310) target = $region52
        $region51: #{diae_forward.2} parent=39 // pred_region
          %313 = vst [vmem:[#allocation2] sm:$0xff] 0.0
          %314 = vst [vmem:[#allocation2 + $0x8] sm:$0xff] 0.0
        $region52: #{diae_forward.2} parent=39 // pred_fallthru
          _
        %v315 = vld [vmem:[#allocation2] sm:$0xff]
        %v316 = vld [vmem:[#allocation2 + $0x8] sm:$0xff]
        %v317 = vld [vmem:[%s301] sm:$0xff]
        %v318 = vld [vmem:[%s301 + $0x8] sm:$0xff]
        %v319 = vld [vmem:[%s254] sm:$0xff]
        %v320 = vld [vmem:[%s254 + $0x8] sm:$0xff]
        %v321 = vld [vmem:[%s254 + $0x10] sm:$0xff]
        %v322 = vld [vmem:[%s254 + $0x18] sm:$0xff]
        %v323 = vld [vmem:[%s254 + $0x20] sm:$0xff]
        %v324 = vld [vmem:[%s254 + $0x28] sm:$0xff]
        %v325 = vld [vmem:[%s254 + $0x30] sm:$0xff]
        %v326 = vld [vmem:[%s254 + $0x38] sm:$0xff]
        %v327 = vld [vmem:[%s254 + $0x40] sm:$0xff]
        %v328 = vld [vmem:[%s254 + $0x48] sm:$0xff]
        %v329 = vld [vmem:[%s254 + $0x50] sm:$0xff]
        %v330 = vld [vmem:[%s254 + $0x58] sm:$0xff]
        %v331 = vld [vmem:[%s254 + $0x60] sm:$0xff]
        %v332 = vld [vmem:[%s254 + $0x68] sm:$0xff]
        %v333 = vld [vmem:[%s254 + $0x70] sm:$0xff]
        %v334 = vld [vmem:[%s254 + $0x78] sm:$0xff]
        %v335 = vld [vmem:[%s254 + $0x80] sm:$0xff]
        %v336 = vld [vmem:[%s254 + $0x88] sm:$0xff]
        %v337 = vld [vmem:[%s254 + $0x90] sm:$0xff]
        %v338 = vld [vmem:[%s254 + $0x98] sm:$0xff]
        %v339 = vld [vmem:[%s254 + $0xa0] sm:$0xff]
        %v340 = vld [vmem:[%s254 + $0xa8] sm:$0xff]
        %v341 = vld [vmem:[%s254 + $0xb0] sm:$0xff]
        %v342 = vld [vmem:[%s254 + $0xb8] sm:$0xff]
        %v343 = vld [vmem:[%s254 + $0xc0] sm:$0xff]
        %v344 = vld [vmem:[%s254 + $0xc8] sm:$0xff]
        %v345 = vld [vmem:[%s254 + $0xd0] sm:$0xff]
        %v346 = vld [vmem:[%s254 + $0xd8] sm:$0xff]
        %v347 = vld [vmem:[%s254 + $0xe0] sm:$0xff]
        %v348 = vld [vmem:[%s254 + $0xe8] sm:$0xff]
        %v349 = vld [vmem:[%s254 + $0xf0] sm:$0xff]
        %v350 = vld [vmem:[%s254 + $0xf8] sm:$0xff]
        %v351 = vld [vmem:[%s254 + $0x100] sm:$0xff]
        %v352 = vld [vmem:[%s254 + $0x108] sm:$0xff]
        %v353 = vld [vmem:[%s254 + $0x110] sm:$0xff]
        %v354 = vld [vmem:[%s254 + $0x118] sm:$0xff]
        %v355 = vld [vmem:[%s254 + $0x120] sm:$0xff]
        %v356 = vld [vmem:[%s254 + $0x128] sm:$0xff]
        %v357 = vld [vmem:[%s254 + $0x130] sm:$0xff]
        %v358 = vld [vmem:[%s254 + $0x138] sm:$0xff]
        %v359 = vld [vmem:[%s254 + $0x140] sm:$0xff]
        %v360 = vld [vmem:[%s254 + $0x148] sm:$0xff]
        %v361 = vld [vmem:[%s254 + $0x150] sm:$0xff]
        %v362 = vld [vmem:[%s254 + $0x158] sm:$0xff]
        %v363 = vld [vmem:[%s254 + $0x160] sm:$0xff]
        %v364 = vld [vmem:[%s254 + $0x168] sm:$0xff]
        %v365 = vld [vmem:[%s254 + $0x170] sm:$0xff]
        %v366 = vld [vmem:[%s254 + $0x178] sm:$0xff]
        %v367 = vld [vmem:[%s254 + $0x180] sm:$0xff]
        %v368 = vld [vmem:[%s254 + $0x188] sm:$0xff]
        %v369 = vld [vmem:[%s254 + $0x190] sm:$0xff]
        %v370 = vld [vmem:[%s254 + $0x198] sm:$0xff]
        %v371 = vld [vmem:[%s254 + $0x1a0] sm:$0xff]
        %v372 = vld [vmem:[%s254 + $0x1a8] sm:$0xff]
        %v373 = vld [vmem:[%s254 + $0x1b0] sm:$0xff]
        %v374 = vld [vmem:[%s254 + $0x1b8] sm:$0xff]
        %v375 = vld [vmem:[%s254 + $0x1c0] sm:$0xff]
        %v376 = vld [vmem:[%s254 + $0x1c8] sm:$0xff]
        %v377 = vld [vmem:[%s254 + $0x1d0] sm:$0xff]
        %v378 = vld [vmem:[%s254 + $0x1d8] sm:$0xff]
        %v379 = vld [vmem:[%s254 + $0x1e0] sm:$0xff]
        %v380 = vld [vmem:[%s254 + $0x1e8] sm:$0xff]
        %v381 = vld [vmem:[%s254 + $0x1f0] sm:$0xff]
        %v382 = vld [vmem:[%s254 + $0x1f8] sm:$0xff]
        %v385 = vunpack.c.l.b16 %v317
        %v386 = vunpack.c.h.b16 %v317
        %v387 = vunpack.c.l.b16 %v318
        %v388 = vunpack.c.h.b16 %v318
        %v389 = vpack.c.b16 %v385, %v385
        %v390 = vpack.c.b16 %v386, %v386
        %v391 = vpack.c.b16 %v387, %v387
        %v392 = vpack.c.b16 %v388, %v388
        %v461 = vunpack.c.l.b16 %v319
        %v462 = vunpack.c.h.b16 %v319
        %v463 = vunpack.c.l.b16 %v320
        %v464 = vunpack.c.h.b16 %v320
        %v465 = vunpack.c.l.b16 %v321
        %v466 = vunpack.c.h.b16 %v321
        %v467 = vunpack.c.l.b16 %v322
        %v468 = vunpack.c.h.b16 %v322
        %v469 = vunpack.c.l.b16 %v323
        %v470 = vunpack.c.h.b16 %v323
        %v471 = vunpack.c.l.b16 %v324
        %v472 = vunpack.c.h.b16 %v324
        %v473 = vunpack.c.l.b16 %v325
        %v474 = vunpack.c.h.b16 %v325
        %v475 = vunpack.c.l.b16 %v326
        %v476 = vunpack.c.h.b16 %v326
        %v477 = vunpack.c.l.b16 %v327
        %v478 = vunpack.c.h.b16 %v327
        %v479 = vunpack.c.l.b16 %v328
        %v480 = vunpack.c.h.b16 %v328
        %v481 = vunpack.c.l.b16 %v329
        %v482 = vunpack.c.h.b16 %v329
        %v483 = vunpack.c.l.b16 %v330
        %v484 = vunpack.c.h.b16 %v330
        %v485 = vunpack.c.l.b16 %v331
        %v486 = vunpack.c.h.b16 %v331
        %v487 = vunpack.c.l.b16 %v332
        %v488 = vunpack.c.h.b16 %v332
        %v489 = vunpack.c.l.b16 %v333
        %v490 = vunpack.c.h.b16 %v333
        %v491 = vunpack.c.l.b16 %v334
        %v492 = vunpack.c.h.b16 %v334
        %v493 = vunpack.c.l.b16 %v335
        %v494 = vunpack.c.h.b16 %v335
        %v495 = vunpack.c.l.b16 %v336
        %v496 = vunpack.c.h.b16 %v336
        %v497 = vunpack.c.l.b16 %v337
        %v498 = vunpack.c.h.b16 %v337
        %v499 = vunpack.c.l.b16 %v338
        %v500 = vunpack.c.h.b16 %v338
        %v501 = vunpack.c.l.b16 %v339
        %v502 = vunpack.c.h.b16 %v339
        %v503 = vunpack.c.l.b16 %v340
        %v504 = vunpack.c.h.b16 %v340
        %v505 = vunpack.c.l.b16 %v341
        %v506 = vunpack.c.h.b16 %v341
        %v507 = vunpack.c.l.b16 %v342
        %v508 = vunpack.c.h.b16 %v342
        %v509 = vunpack.c.l.b16 %v343
        %v510 = vunpack.c.h.b16 %v343
        %v511 = vunpack.c.l.b16 %v344
        %v512 = vunpack.c.h.b16 %v344
        %v513 = vunpack.c.l.b16 %v345
        %v514 = vunpack.c.h.b16 %v345
        %v515 = vunpack.c.l.b16 %v346
        %v516 = vunpack.c.h.b16 %v346
        %v517 = vunpack.c.l.b16 %v347
        %v518 = vunpack.c.h.b16 %v347
        %v519 = vunpack.c.l.b16 %v348
        %v520 = vunpack.c.h.b16 %v348
        %v521 = vunpack.c.l.b16 %v349
        %v522 = vunpack.c.h.b16 %v349
        %v523 = vunpack.c.l.b16 %v350
        %v524 = vunpack.c.h.b16 %v350
        %v525 = vunpack.c.l.b16 %v351
        %v526 = vunpack.c.h.b16 %v351
        %v527 = vunpack.c.l.b16 %v352
        %v528 = vunpack.c.h.b16 %v352
        %v529 = vunpack.c.l.b16 %v353
        %v530 = vunpack.c.h.b16 %v353
        %v531 = vunpack.c.l.b16 %v354
        %v532 = vunpack.c.h.b16 %v354
        %v533 = vunpack.c.l.b16 %v355
        %v534 = vunpack.c.h.b16 %v355
        %v535 = vunpack.c.l.b16 %v356
        %v536 = vunpack.c.h.b16 %v356
        %v537 = vunpack.c.l.b16 %v357
        %v538 = vunpack.c.h.b16 %v357
        %v539 = vunpack.c.l.b16 %v358
        %v540 = vunpack.c.h.b16 %v358
        %v541 = vunpack.c.l.b16 %v359
        %v542 = vunpack.c.h.b16 %v359
        %v543 = vunpack.c.l.b16 %v360
        %v544 = vunpack.c.h.b16 %v360
        %v545 = vunpack.c.l.b16 %v361
        %v546 = vunpack.c.h.b16 %v361
        %v547 = vunpack.c.l.b16 %v362
        %v548 = vunpack.c.h.b16 %v362
        %v549 = vunpack.c.l.b16 %v363
        %v550 = vunpack.c.h.b16 %v363
        %v551 = vunpack.c.l.b16 %v364
        %v552 = vunpack.c.h.b16 %v364
        %v553 = vunpack.c.l.b16 %v365
        %v554 = vunpack.c.h.b16 %v365
        %v555 = vunpack.c.l.b16 %v366
        %v556 = vunpack.c.h.b16 %v366
        %v557 = vunpack.c.l.b16 %v367
        %v558 = vunpack.c.h.b16 %v367
        %v559 = vunpack.c.l.b16 %v368
        %v560 = vunpack.c.h.b16 %v368
        %v561 = vunpack.c.l.b16 %v369
        %v562 = vunpack.c.h.b16 %v369
        %v563 = vunpack.c.l.b16 %v370
        %v564 = vunpack.c.h.b16 %v370
        %v565 = vunpack.c.l.b16 %v371
        %v566 = vunpack.c.h.b16 %v371
        %v567 = vunpack.c.l.b16 %v372
        %v568 = vunpack.c.h.b16 %v372
        %v569 = vunpack.c.l.b16 %v373
        %v570 = vunpack.c.h.b16 %v373
        %v571 = vunpack.c.l.b16 %v374
        %v572 = vunpack.c.h.b16 %v374
        %v573 = vunpack.c.l.b16 %v375
        %v574 = vunpack.c.h.b16 %v375
        %v575 = vunpack.c.l.b16 %v376
        %v576 = vunpack.c.h.b16 %v376
        %v577 = vunpack.c.l.b16 %v377
        %v578 = vunpack.c.h.b16 %v377
        %v579 = vunpack.c.l.b16 %v378
        %v580 = vunpack.c.h.b16 %v378
        %v581 = vunpack.c.l.b16 %v379
        %v582 = vunpack.c.h.b16 %v379
        %v583 = vunpack.c.l.b16 %v380
        %v584 = vunpack.c.h.b16 %v380
        %v585 = vunpack.c.l.b16 %v381
        %v586 = vunpack.c.h.b16 %v381
        %v587 = vunpack.c.l.b16 %v382
        %v588 = vunpack.c.h.b16 %v382
        %v589 = vpack.c.b16 %v463, %v461
        %v590 = vpack.c.b16 %v464, %v462
        %v591 = vpack.c.b16 %v467, %v465
        %v592 = vpack.c.b16 %v468, %v466
        %v593 = vpack.c.b16 %v471, %v469
        %v594 = vpack.c.b16 %v472, %v470
        %v595 = vpack.c.b16 %v475, %v473
        %v596 = vpack.c.b16 %v476, %v474
        %v597 = vpack.c.b16 %v479, %v477
        %v598 = vpack.c.b16 %v480, %v478
        %v599 = vpack.c.b16 %v483, %v481
        %v600 = vpack.c.b16 %v484, %v482
        %v601 = vpack.c.b16 %v487, %v485
        %v602 = vpack.c.b16 %v488, %v486
        %v603 = vpack.c.b16 %v491, %v489
        %v604 = vpack.c.b16 %v492, %v490
        %v605 = vpack.c.b16 %v495, %v493
        %v606 = vpack.c.b16 %v496, %v494
        %v607 = vpack.c.b16 %v499, %v497
        %v608 = vpack.c.b16 %v500, %v498
        %v609 = vpack.c.b16 %v503, %v501
        %v610 = vpack.c.b16 %v504, %v502
        %v611 = vpack.c.b16 %v507, %v505
        %v612 = vpack.c.b16 %v508, %v506
        %v613 = vpack.c.b16 %v511, %v509
        %v614 = vpack.c.b16 %v512, %v510
        %v615 = vpack.c.b16 %v515, %v513
        %v616 = vpack.c.b16 %v516, %v514
        %v617 = vpack.c.b16 %v519, %v517
        %v618 = vpack.c.b16 %v520, %v518
        %v619 = vpack.c.b16 %v523, %v521
        %v620 = vpack.c.b16 %v524, %v522
        %v621 = vpack.c.b16 %v527, %v525
        %v622 = vpack.c.b16 %v528, %v526
        %v623 = vpack.c.b16 %v531, %v529
        %v624 = vpack.c.b16 %v532, %v530
        %v625 = vpack.c.b16 %v535, %v533
        %v626 = vpack.c.b16 %v536, %v534
        %v627 = vpack.c.b16 %v539, %v537
        %v628 = vpack.c.b16 %v540, %v538
        %v629 = vpack.c.b16 %v543, %v541
        %v630 = vpack.c.b16 %v544, %v542
        %v631 = vpack.c.b16 %v547, %v545
        %v632 = vpack.c.b16 %v548, %v546
        %v633 = vpack.c.b16 %v551, %v549
        %v634 = vpack.c.b16 %v552, %v550
        %v635 = vpack.c.b16 %v555, %v553
        %v636 = vpack.c.b16 %v556, %v554
        %v637 = vpack.c.b16 %v559, %v557
        %v638 = vpack.c.b16 %v560, %v558
        %v639 = vpack.c.b16 %v563, %v561
        %v640 = vpack.c.b16 %v564, %v562
        %v641 = vpack.c.b16 %v567, %v565
        %v642 = vpack.c.b16 %v568, %v566
        %v643 = vpack.c.b16 %v571, %v569
        %v644 = vpack.c.b16 %v572, %v570
        %v645 = vpack.c.b16 %v575, %v573
        %v646 = vpack.c.b16 %v576, %v574
        %v647 = vpack.c.b16 %v579, %v577
        %v648 = vpack.c.b16 %v580, %v578
        %v649 = vpack.c.b16 %v583, %v581
        %v650 = vpack.c.b16 %v584, %v582
        %v651 = vpack.c.b16 %v587, %v585
        %v652 = vpack.c.b16 %v588, %v586
        %717 = vmatprep.subr.bf16.mxu0 %v604
        %718 = vmatpush1.bf16.msra.mxu0 %v603
        %719 = vmatprep.subr.bf16.mxu0 %v602
        %720 = vmatpush1.bf16.msra.mxu0 %v601
        %721 = vmatprep.subr.bf16.mxu0 %v600
        %722 = vmatpush1.bf16.msra.mxu0 %v599
        %723 = vmatprep.subr.bf16.mxu0 %v598
        %724 = vmatpush1.bf16.msra.mxu0 %v597
        %725 = vmatprep.subr.bf16.mxu0 %v596
        %726 = vmatpush1.bf16.msra.mxu0 %v595
        %727 = vmatprep.subr.bf16.mxu0 %v594
        %728 = vmatpush1.bf16.msra.mxu0 %v593
        %729 = vmatprep.subr.bf16.mxu0 %v592
        %730 = vmatpush1.bf16.msra.mxu0 %v591
        %731 = vmatprep.subr.bf16.mxu0 %v590
        %732 = vmatpush1.bf16.msra.mxu0 %v589
        %733 = vmatprep.subr.bf16.mxu0 %v620
        %734 = vmatpush2.bf16.msra.mxu0 %v619
        %735 = vmatprep.subr.bf16.mxu0 %v618
        %736 = vmatpush2.bf16.msra.mxu0 %v617
        %737 = vmatprep.subr.bf16.mxu0 %v616
        %738 = vmatpush2.bf16.msra.mxu0 %v615
        %739 = vmatprep.subr.bf16.mxu0 %v614
        %740 = vmatpush2.bf16.msra.mxu0 %v613
        %741 = vmatprep.subr.bf16.mxu0 %v612
        %742 = vmatpush2.bf16.msra.mxu0 %v611
        %743 = vmatprep.subr.bf16.mxu0 %v610
        %744 = vmatpush2.bf16.msra.mxu0 %v609
        %745 = vmatprep.subr.bf16.mxu0 %v608
        %746 = vmatpush2.bf16.msra.mxu0 %v607
        %747 = vmatprep.subr.bf16.mxu0 %v606
        %748 = vmatpush2.bf16.msra.mxu0 %v605
        %749 = vmatprep.mubr.bf16.mxu0 %v390
        %750 = vmatmul.mubr.bf16.gmra.mxu0 %v389
        %v751 = vpop.f32.mrf.mxu0
        %v752 = vadd.f32 0.0, %v751
        %v753 = vpop.f32.mrf.mxu0
        %v754 = vadd.f32 0.0, %v753
        %v755 = vpop.f32.mrf.mxu0
        %v756 = vpop.f32.mrf.mxu0
        %757 = vdwg.mxu0
        %758 = vmatprep.subr.bf16.mxu0 %v636
        %759 = vmatpush1.bf16.msra.mxu0 %v635
        %760 = vmatprep.subr.bf16.mxu0 %v634
        %761 = vmatpush1.bf16.msra.mxu0 %v633
        %762 = vmatprep.subr.bf16.mxu0 %v632
        %763 = vmatpush1.bf16.msra.mxu0 %v631
        %764 = vmatprep.subr.bf16.mxu0 %v630
        %765 = vmatpush1.bf16.msra.mxu0 %v629
        %766 = vmatprep.subr.bf16.mxu0 %v628
        %767 = vmatpush1.bf16.msra.mxu0 %v627
        %768 = vmatprep.subr.bf16.mxu0 %v626
        %769 = vmatpush1.bf16.msra.mxu0 %v625
        %770 = vmatprep.subr.bf16.mxu0 %v624
        %771 = vmatpush1.bf16.msra.mxu0 %v623
        %772 = vmatprep.subr.bf16.mxu0 %v622
        %773 = vmatpush1.bf16.msra.mxu0 %v621
        %774 = vmatprep.subr.bf16.mxu0 %v652
        %775 = vmatpush2.bf16.msra.mxu0 %v651
        %776 = vmatprep.subr.bf16.mxu0 %v650
        %777 = vmatpush2.bf16.msra.mxu0 %v649
        %778 = vmatprep.subr.bf16.mxu0 %v648
        %779 = vmatpush2.bf16.msra.mxu0 %v647
        %780 = vmatprep.subr.bf16.mxu0 %v646
        %781 = vmatpush2.bf16.msra.mxu0 %v645
        %782 = vmatprep.subr.bf16.mxu0 %v644
        %783 = vmatpush2.bf16.msra.mxu0 %v643
        %784 = vmatprep.subr.bf16.mxu0 %v642
        %785 = vmatpush2.bf16.msra.mxu0 %v641
        %786 = vmatprep.subr.bf16.mxu0 %v640
        %787 = vmatpush2.bf16.msra.mxu0 %v639
        %788 = vmatprep.subr.bf16.mxu0 %v638
        %789 = vmatpush2.bf16.msra.mxu0 %v637
        %790 = vmatprep.mubr.bf16.mxu0 %v392
        %791 = vmatmul.mubr.bf16.gmra.mxu0 %v391
        %v792 = vpop.f32.mrf.mxu0
        %v793 = vadd.f32 %v752, %v792
        %v794 = vpop.f32.mrf.mxu0
        %v795 = vadd.f32 %v754, %v794
        %v796 = vpop.f32.mrf.mxu0
        %v797 = vpop.f32.mrf.mxu0
        %798 = vdwg.mxu0
        %v799 = vadd.f32 %v315, %v793
        %v800 = vadd.f32 %v316, %v795
        %801 = vst [vmem:[#allocation2] sm:$0xff] %v799
        %802 = vst [vmem:[#allocation2 + $0x8] sm:$0xff] %v800
        %p803 = scmp.eq.s32.totalorder %s25, 1
        // Predicated region
        $region53: #{diae_forward.2} parent=39 // pred_check
          %p804 = pneg %p803
        $region54: #{diae_forward.2} parent=39 // pred_check_branch
          %806 = sbr.rel (%p804) target = $region56
        $region55: #{diae_forward.2} parent=39 // pred_region
          %v807 = vld [vmem:[#allocation2] sm:$0xff]
          %v808 = vld [vmem:[#allocation2 + $0x8] sm:$0xff]
          %v809 = vld [vmem:[%s2] sm:$0x3]
          %v811 = vlaneseq
          %v812 = vshrl.u32 %v811, 7
          %v813 = vsub.s32 0, %v812
          %v814 = vrot.slane %v809, %v813
          %v815 = vlaneseq
          %v816 = vshrl.u32 %v815, 7
          %v817 = vsub.s32 1, %v816
          %v818 = vrot.slane %v809, %v817
          %v821 = vadd.f32 %v807, %v814
          %v822 = vadd.f32 %v808, %v818
          %v823 = vxor.u32 %v821, 2147483648
          %v824 = vxor.u32 %v822, 2147483648
          %v825 = vmul.f32 %v823, 1.442695
          %v826 = vpow.pop %v825
          %v827 = vmul.f32 %v824, 1.442695
          %v828 = vpow.pop %v827
          %v829 = vadd.f32 %v826, 1.0
          %v830 = vadd.f32 %v828, 1.0
          %v831 = vrcp.pop %v829
          %v832 = vmul.f32 1.0, %v831
          %v833 = vrcp.pop %v830
          %v834 = vmul.f32 1.0, %v833
          %v835 = vpack.c.bf16 %v832, %v832
          %v836 = vpack.c.bf16 %v834, %v834
          %v837 = vld [vmem:[#allocation5] sm:$0xff]
          %v838 = vld [vmem:[#allocation5 + $0x8] sm:$0xff]
          %v839 = vld [vmem:[#allocation5 + $0x10] sm:$0xff]
          %v840 = vld [vmem:[#allocation5 + $0x18] sm:$0xff]
          %v841 = vld [vmem:[#allocation5 + $0x20] sm:$0xff]
          %v842 = vld [vmem:[#allocation5 + $0x28] sm:$0xff]
          %v843 = vld [vmem:[#allocation5 + $0x30] sm:$0xff]
          %v844 = vld [vmem:[#allocation5 + $0x38] sm:$0xff]
          %v845 = vld [vmem:[#allocation5 + $0x40] sm:$0xff]
          %v846 = vld [vmem:[#allocation5 + $0x48] sm:$0xff]
          %v847 = vld [vmem:[#allocation5 + $0x50] sm:$0xff]
          %v848 = vld [vmem:[#allocation5 + $0x58] sm:$0xff]
          %v849 = vld [vmem:[#allocation5 + $0x60] sm:$0xff]
          %v850 = vld [vmem:[#allocation5 + $0x68] sm:$0xff]
          %v851 = vld [vmem:[#allocation5 + $0x70] sm:$0xff]
          %v852 = vld [vmem:[#allocation5 + $0x78] sm:$0xff]
          %v853 = vld [vmem:[%s4] sm:$0x1]
          %v855 = vlaneseq
          %v856 = vshrl.u32 %v855, 7
          %v857 = vsub.s32 0, %v856
          %v858 = vrot.slane %v853, %v857
          %v876 = vunpack.c.l.b16 %v837
          %v877 = vunpack.c.h.b16 %v837
          %v878 = vunpack.c.l.b16 %v838
          %v879 = vunpack.c.h.b16 %v838
          %v880 = vunpack.c.l.b16 %v839
          %v881 = vunpack.c.h.b16 %v839
          %v882 = vunpack.c.l.b16 %v840
          %v883 = vunpack.c.h.b16 %v840
          %v884 = vunpack.c.l.b16 %v841
          %v885 = vunpack.c.h.b16 %v841
          %v886 = vunpack.c.l.b16 %v842
          %v887 = vunpack.c.h.b16 %v842
          %v888 = vunpack.c.l.b16 %v843
          %v889 = vunpack.c.h.b16 %v843
          %v890 = vunpack.c.l.b16 %v844
          %v891 = vunpack.c.h.b16 %v844
          %v892 = vunpack.c.l.b16 %v845
          %v893 = vunpack.c.h.b16 %v845
          %v894 = vunpack.c.l.b16 %v846
          %v895 = vunpack.c.h.b16 %v846
          %v896 = vunpack.c.l.b16 %v847
          %v897 = vunpack.c.h.b16 %v847
          %v898 = vunpack.c.l.b16 %v848
          %v899 = vunpack.c.h.b16 %v848
          %v900 = vunpack.c.l.b16 %v849
          %v901 = vunpack.c.h.b16 %v849
          %v902 = vunpack.c.l.b16 %v850
          %v903 = vunpack.c.h.b16 %v850
          %v904 = vunpack.c.l.b16 %v851
          %v905 = vunpack.c.h.b16 %v851
          %v906 = vunpack.c.l.b16 %v852
          %v907 = vunpack.c.h.b16 %v852
          %v908 = vpack.c.b16 %v878, %v876
          %v909 = vpack.c.b16 %v879, %v877
          %v910 = vpack.c.b16 %v882, %v880
          %v911 = vpack.c.b16 %v883, %v881
          %v912 = vpack.c.b16 %v886, %v884
          %v913 = vpack.c.b16 %v887, %v885
          %v914 = vpack.c.b16 %v890, %v888
          %v915 = vpack.c.b16 %v891, %v889
          %v916 = vpack.c.b16 %v894, %v892
          %v917 = vpack.c.b16 %v895, %v893
          %v918 = vpack.c.b16 %v898, %v896
          %v919 = vpack.c.b16 %v899, %v897
          %v920 = vpack.c.b16 %v902, %v900
          %v921 = vpack.c.b16 %v903, %v901
          %v922 = vpack.c.b16 %v906, %v904
          %v923 = vpack.c.b16 %v907, %v905
          %940 = vmatprep.subr.bf16.mxu0 %v923
          %941 = vmatpush1.bf16.xpose.msra.mxu0 %v922
          %942 = vmatprep.subr.bf16.mxu0 %v921
          %943 = vmatpush1.bf16.xpose.msra.mxu0 %v920
          %944 = vmatprep.subr.bf16.mxu0 %v919
          %945 = vmatpush1.bf16.xpose.msra.mxu0 %v918
          %946 = vmatprep.subr.bf16.mxu0 %v917
          %947 = vmatpush1.bf16.xpose.msra.mxu0 %v916
          %948 = vmatprep.subr.bf16.mxu0 %v915
          %949 = vmatpush1.bf16.xpose.msra.mxu0 %v914
          %950 = vmatprep.subr.bf16.mxu0 %v913
          %951 = vmatpush1.bf16.xpose.msra.mxu0 %v912
          %952 = vmatprep.subr.bf16.mxu0 %v911
          %953 = vmatpush1.bf16.xpose.msra.mxu0 %v910
          %954 = vmatprep.subr.bf16.mxu0 %v909
          %955 = vmatpush1.bf16.xpose.msra.mxu0 %v908
          %956 = vmatprep.subr.bf16.mxu0 0
          %957 = vmatpush2.bf16.xpose.msra.mxu0 0
          %958 = vmatprep.subr.bf16.mxu0 0
          %959 = vmatpush2.bf16.xpose.msra.mxu0 0
          %960 = vmatprep.subr.bf16.mxu0 0
          %961 = vmatpush2.bf16.xpose.msra.mxu0 0
          %962 = vmatprep.subr.bf16.mxu0 0
          %963 = vmatpush2.bf16.xpose.msra.mxu0 0
          %964 = vmatprep.subr.bf16.mxu0 0
          %965 = vmatpush2.bf16.xpose.msra.mxu0 0
          %966 = vmatprep.subr.bf16.mxu0 0
          %967 = vmatpush2.bf16.xpose.msra.mxu0 0
          %968 = vmatprep.subr.bf16.mxu0 0
          %969 = vmatpush2.bf16.xpose.msra.mxu0 0
          %970 = vmatprep.subr.bf16.mxu0 0
          %971 = vmatpush2.bf16.xpose.msra.mxu0 0
          %972 = vmatprep.mubr.bf16.mxu0 %v836
          %973 = vmatmul.mubr.bf16.gmra.mxu0 %v835
          %v974 = vpop.f32.mrf.mxu0
          %v975 = vadd.f32 %v858, %v974
          %v976 = vpop.f32.mrf.mxu0
          %v977 = vpop.f32.mrf.mxu0
          %v978 = vpop.f32.mrf.mxu0
          %979 = vdwg.mxu0
          %v980 = vpack.c.bf16 %v975, %v975
          %981 = vst [vmem:[%s307] sm:$0xf] %v980
        $region56: #{diae_forward.2} parent=39 // pred_fallthru
          _
        %p982 = scmp.lt.s32.totalorder %s24, 0
        %s983 = scalar_select %p982, %s24, 0
        %s984 = smul.addr %s983, 4
        %s985 = scalar_lea.vmem %s5, %s984
        // Predicated region
        $region57: #{diae_forward.2} parent=39 // pred_check
          %p986 = pneg %p167
        $region58: #{diae_forward.2} parent=39 // pred_check_branch
          %988 = sbr.rel (%p986) target = $region60
        $region59: #{diae_forward.2} parent=39 // pred_region
          _
        $region60: #{diae_forward.2} parent=39 // pred_fallthru
          _
        // Predicated region
        $region61: #{diae_forward.2} parent=39 // pred_check
          %p989 = pneg %p167
        $region62: #{diae_forward.2} parent=39 // pred_check_branch
          %991 = sbr.rel (%p989) target = $region64
        $region63: #{diae_forward.2} parent=39 // pred_region
          %p992 = scmp.lt.s32.totalorder %s24, 0
          %s993 = scalar_select %p992, %s24, 0
          %s994 = smul.addr %s993, 4
          %s995 = scalar_lea.vmem %s5, %s994
        $region64: #{diae_forward.2} parent=39 // pred_fallthru
          _
      $region40: #{diae_forward.2} parent=5 // pred_fallthru
        _
      %p996 = scmp.le.s32.totalorder 2, %s15
      // Predicated region
      $region65: #{diae_forward.2} parent=5 // pred_check
        %p997 = pneg %p996
      $region66: #{diae_forward.2} parent=5 // pred_check_branch
        %999 = sbr.rel (%p997) target = $region68
      $region67: #{diae_forward.2} parent=5 // pred_region
        %s1000 = ssub.s32 %s15, 2
      $region68: #{diae_forward.2} parent=5 // pred_fallthru
        _
    $region6: #{diae_forward.2} parent=1 // loop_footer
      %s19 = sadd.s32 1, %s15
    $region7: #{diae_forward.2} parent=1 // loop_footer_branch
      %14 = sbr.rel target = $region3
    $region8: #{diae_forward.2} parent=1 // loop_exit
      _
    %1001 = vsyncpa [#allocation4], 1
    %s1002 = scalar_lea.sflag [#allocation4], 1
    %1003 = vsyncpa %s1002, 1
    %1004 = vsyncpa [#allocation6], 1

</llo_original>
